<compile_context>
chip_gen: v5e
topology: v5e:2x2
jax: 0.10.0
libtpu: 0.0.40
codegen_flags: <defaults>
</compile_context>

<pallas_src>
import functools

import jax
import jax.numpy as jnp
from jax import lax
from jax.experimental import pallas as pl
from jax.experimental.pallas import tpu as pltpu

DILATIONS = (8, 4, 2, 1)
K_FINAL = 16
STRIDE_FINAL = 8
LANE = 128


def decoder_kernel(x_ref, wdil_ref, bdil_ref, alpha_ref, w5p_ref, b5_ref, out_ref,
                   *, block_b, seq_len, n_chan, n_pad, compact):
    """One grid step processes `block_b` batch items folded along matmul M.

    x_ref    : (block_b*L, n_pad)   bf16  channels-last activations (cols [N,n_pad) zero)
    wdil_ref : (4, kc, n_pad)       bf16  fused 3-tap weights (kc = 128 or 3*n_pad)
    bdil_ref : (4, 1, n_pad)        f32
    alpha_ref: (4,)                 f32   SMEM (PReLU scalar weights)
    w5p_ref  : (n_pad, 16)          bf16  final weights, cols 0..7 -> h[m], 8..15 -> h[m-1]
    b5_ref   : (1,)                 f32   SMEM
    out_ref  : (block_b, L+1, 8)    f32   out[b, m, r] = y[b, 8*m + r]
    """
    L = seq_len
    N = n_chan
    M = block_b * L

    # Activations stay channels-last and bf16-resident between layers.  The
    # padding columns [N, n_pad) are zero on entry and are preserved by the
    # zero weight rows/cols, so they never leak into real channels.
    h = x_ref[...]                                               # (M, n_pad) bf16

    # Per-row local time index (batch items folded along rows): (M, 1) only.
    t = lax.broadcasted_iota(jnp.int32, (M, 1), 0) % L

    # ---- 4 x [ConvTranspose1d(N, N, k=3, s=1, dil=d, pad=d) + PReLU] ----
    # y[t] = h[t+d] @ W0 + h[t] @ W1 + h[t-d] @ W2 + b   (h == 0 outside [0, L))
    for l, d in enumerate(DILATIONS):
        # Time-shift halos on a transient f32 copy (clean sublane rolls on all
        # generations, f32 mask/select math); persistent h stays bf16.
        h32 = h.astype(jnp.float32)
        up = pltpu.roll(h32, M - d, axis=0)                      # h[(g+d) mod M]
        dn = pltpu.roll(h32, d, axis=0)                          # h[(g-d) mod M]
        h_plus = jnp.where(t < L - d, up, 0.0)                   # zero across item boundary
        h_minus = jnp.where(t >= d, dn, 0.0)
        if compact:
            # 3*N <= 128: pack the taps at N-column granularity via XLU lane
            # rolls -> K = 128 contraction, single small bf16 cast of hcat.
            hcat = (h_plus
                    + pltpu.roll(h32, N, axis=1)
                    + pltpu.roll(h_minus, 2 * N, axis=1)).astype(jnp.bfloat16)
        else:
            # aligned lane concat (offsets are multiples of 128)
            hcat = jnp.concatenate(
                [h_plus.astype(jnp.bfloat16), h, h_minus.astype(jnp.bfloat16)],
                axis=1)                                          # (M, 3*n_pad) bf16
        y = jnp.dot(hcat, wdil_ref[l],
                    preferred_element_type=jnp.float32) + bdil_ref[l]
        a = alpha_ref[l]                                         # PReLU scalar (SMEM)
        h = jnp.where(y > 0, y, a * y).astype(jnp.bfloat16)      # cast once per layer

    # ---- final ConvTranspose1d(N, 1, kernel=16, stride=8, bias) ----
    # y[8m + r] = b5 + h[m].w5[:, r] + h[m-1].w5[:, r+8],  m in [0, L].
    # One fused matmul over all folded rows; overlap-add on the tiny (M, 16)
    # f32 result; output emitted as (block_b, L+1, 8) (row-major flatten gives
    # the 8*m + r interleave directly, no transpose anywhere).
    z = jnp.dot(h, w5p_ref[...], preferred_element_type=jnp.float32)   # (M, 16)
    b5 = b5_ref[0]
    z_prev = jnp.where(t >= 1, pltpu.roll(z, 1, axis=0), 0.0)           # z[g-1] within item
    main = z[:, 0:STRIDE_FINAL] + z_prev[:, STRIDE_FINAL:] + b5         # (M, 8)
    out_ref[:, 0:L, :] = main.reshape(block_b, L, STRIDE_FINAL)
    # m == L only receives the high-tap contribution of h[L-1]
    z_hi = z[:, STRIDE_FINAL:].reshape(block_b, L, STRIDE_FINAL)
    out_ref[:, L:L + 1, :] = z_hi[:, L - 1:L, :] + b5


def _live_vmem_bytes(block_b, L, n_pad, kc):
    """Rough per-grid-step live-set estimate: I/O blocks, weights, temporaries."""
    M = block_b * L
    x_io = 2 * M * n_pad * 2                                     # input block, 2 bufs, bf16
    out_io = 2 * block_b * (L + 1) * STRIDE_FINAL * 4            # output block, 2 bufs, f32
    weights = 2 * (4 * kc * n_pad * 2 + 4 * n_pad * 4 + n_pad * K_FINAL * 2)
    # h (bf16) + h32/up/dn/h_plus/h_minus + y (f32) + hcat (bf16)
    temporaries = M * (2 * n_pad + 5 * 4 * n_pad + 2 * kc)
    return x_io + out_io + weights + temporaries


def _choose_block_b(B, L, n_pad, kc, budget_bytes):
    """Largest block_b that divides B, leaves >= 2-4 grid steps (pipelining /
    megacore sharding) and whose live set fits the VMEM budget."""
    min_steps = 4 if B >= 4 else (2 if B >= 2 else 1)
    for bb in range(B, 0, -1):
        if B % bb:
            continue
        if B // bb < min_steps:
            continue
        if _live_vmem_bytes(bb, L, n_pad, kc) <= budget_bytes:
            return bb
    return 1


def decoder_forward_pallas(x_ncl, params, *, block_b=None, interpret=False):
    """x_ncl: (B, N, L) float32 in PyTorch NCL layout.  Returns (B, 8*L + 8)."""
    B, N, L = x_ncl.shape
    assert L % 8 == 0, "sequence length must be a multiple of 8"
    n_pad = ((N + LANE - 1) // LANE) * LANE
    compact = 3 * N <= LANE            # pack taps at N granularity when they fit one lane tile
    kc = LANE if compact else 3 * n_pad
    tap = N if compact else n_pad

    try:
        vmem_cap = int(pltpu.get_tpu_info().vmem_capacity_bytes)
    except Exception:                  # conservative default (v7x: 64 MiB / core)
        vmem_cap = 64 * 1024 * 1024

    if block_b is None:
        block_b = _choose_block_b(B, L, n_pad, kc, (3 * vmem_cap) // 4)
    assert B % block_b == 0

    # --- input: NCL -> channels-last, zero-pad channels, fold batch into rows
    x = jnp.transpose(x_ncl, (0, 2, 1)).astype(jnp.float32)      # (B, L, N)
    x = jnp.pad(x, ((0, 0), (0, 0), (0, n_pad - N)))
    x = x.reshape(B * L, n_pad).astype(jnp.bfloat16)

    # --- dilated layers: ConvTranspose1d weight (Cin, Cout, 3) -> fused (kc, n_pad);
    #     tap k (k=0: h[t+d], k=1: h[t], k=2: h[t-d]) occupies rows [k*tap, k*tap+N).
    w_fused = jnp.zeros((4, kc, n_pad), jnp.float32)
    b_fused = jnp.zeros((4, 1, n_pad), jnp.float32)
    for l in range(4):
        w = params["w_dil"][l]                                   # (N, N, 3)
        for k in range(3):
            w_fused = w_fused.at[l, k * tap:k * tap + N, :N].set(w[:, :, k])
        b_fused = b_fused.at[l, 0, :N].set(params["b_dil"][l])
    w_fused = w_fused.astype(jnp.bfloat16)

    # --- final layer weight (Cin, 1, 16) -> (n_pad, 16):
    #     cols 0..7 = taps applied to h[m], cols 8..15 = taps applied to h[m-1].
    w5p = jnp.zeros((n_pad, K_FINAL), jnp.float32)
    w5p = w5p.at[:N, :].set(params["w5"][:, 0, :])
    w5p = w5p.astype(jnp.bfloat16)

    alphas = params["alphas"].astype(jnp.float32)                # (4,)
    b5 = params["b5"].astype(jnp.float32)                        # (1,)

    grid = (B // block_b,)
    live = _live_vmem_bytes(block_b, L, n_pad, kc)
    vmem_limit = int(min(max(2 * live, 48 * 1024 * 1024),
                         vmem_cap - 8 * 1024 * 1024))

    kernel = functools.partial(decoder_kernel, block_b=block_b, seq_len=L,
                               n_chan=N, n_pad=n_pad, compact=compact)

    const3 = lambda i: (0, 0, 0)      # constant-index blocks: Pallas does not re-fetch them
    const2 = lambda i: (0, 0)

    out3 = pl.pallas_call(
        kernel,
        out_shape=jax.ShapeDtypeStruct((B, L + 1, STRIDE_FINAL), jnp.float32),
        grid=grid,
        in_specs=[
            pl.BlockSpec((block_b * L, n_pad), lambda i: (i, 0)),
            pl.BlockSpec((4, kc, n_pad), const3),
            pl.BlockSpec((4, 1, n_pad), const3),
            pl.BlockSpec(memory_space=pltpu.MemorySpace.SMEM),
            pl.BlockSpec((n_pad, K_FINAL), const2),
            pl.BlockSpec(memory_space=pltpu.MemorySpace.SMEM),
        ],
        out_specs=pl.BlockSpec((block_b, L + 1, STRIDE_FINAL),
                               lambda i: (i, 0, 0)),
        compiler_params=pltpu.CompilerParams(
            dimension_semantics=("parallel",),
            vmem_limit_bytes=vmem_limit),
        interpret=interpret,
    )(x, w_fused, b_fused, alphas, w5p, b5)

    # row-major flatten of (L+1, 8) is exactly the 8*m + r sample ordering
    return out3.reshape(B, STRIDE_FINAL * (L + 1))


def init_params(key, N):
    """Deterministic synthetic parameters matching the module's __init__ shapes."""
    keys = jax.random.split(key, 10)
    w_dil = [0.1 * jax.random.normal(keys[i], (N, N, 3), jnp.float32)
             for i in range(4)]                      # ConvTranspose1d weight (Cin,Cout,K)
    b_dil = [0.1 * jax.random.normal(keys[4 + i], (N,), jnp.float32)
             for i in range(4)]
    alphas = jnp.full((4,), 0.25, jnp.float32)        # PReLU default (num_parameters=1)
    w5 = 0.1 * jax.random.normal(keys[8], (N, 1, K_FINAL), jnp.float32)
    b5 = 0.1 * jax.random.normal(keys[9], (1,), jnp.float32)
    return dict(w_dil=w_dil, b_dil=b_dil, alphas=alphas, w5=w5, b5=b5)


def reference_decoder(x_ncl, params):
    """Pure-JAX f32 reference following PyTorch ConvTranspose1d semantics exactly."""
    dn = ("NCH", "OIH", "NCH")
    h = x_ncl.astype(jnp.float32)
    for i, d in enumerate(DILATIONS):
        wt = params["w_dil"][i]                                   # (Cin, Cout, K)
        wc = jnp.flip(jnp.transpose(wt, (1, 0, 2)), axis=2)       # (Cout, Cin, K)
        y = jax.lax.conv_general_dilated(
            h, wc, window_strides=(1,), padding=[(d, d)],
            lhs_dilation=(1,), rhs_dilation=(d,), dimension_numbers=dn)
        y = y + params["b_dil"][i][None, :, None]
        h = jnp.where(y > 0, y, params["alphas"][i] * y)
    wt5 = params["w5"]                                            # (Cin, 1, 16)
    wc5 = jnp.flip(jnp.transpose(wt5, (1, 0, 2)), axis=2)         # (1, Cin, 16)
    y = jax.lax.conv_general_dilated(
        h, wc5, window_strides=(1,), padding=[(K_FINAL - 1, K_FINAL - 1)],
        lhs_dilation=(STRIDE_FINAL,), rhs_dilation=(1,), dimension_numbers=dn)
    y = y + params["b5"][0]
    return jnp.squeeze(y, axis=1)                                 # (B, 8L+8), B > 1


if __name__ == "__main__":
    B, N, L = 2, 16, 32
    key = jax.random.PRNGKey(0)
    pkey, xkey = jax.random.split(key)
    params = init_params(pkey, N)
    x = jax.random.normal(xkey, (B, N, L), jnp.float32)   # PyTorch N x C x L layout

    out = decoder_forward_pallas(x, params)
    out = jax.block_until_ready(out)

    ref = reference_decoder(x, params)
    assert out.shape == (B, STRIDE_FINAL * L + STRIDE_FINAL), out.shape
    assert out.shape == ref.shape, (out.shape, ref.shape)
    # bf16 MXU operands (f32 accumulation) -> looser tolerance than pure f32.
    max_err = float(jnp.max(jnp.abs(out - ref)))
    assert max_err < 5e-2, f"max abs err {max_err}"
    print("KERNEL_OK")
</pallas_src>

<mosaic_0001>
module attributes {stable_mosaic.version = 11 : i64} {
  func.func @decoder_kernel(%arg0: i32, %arg1: memref<32x128xbf16, #tpu.memory_space<vmem>>, %arg2: memref<4x128x128xbf16, #tpu.memory_space<vmem>>, %arg3: memref<4x1x128xf32, #tpu.memory_space<vmem>>, %arg4: memref<4xf32, #tpu.memory_space<smem>>, %arg5: memref<128x16xbf16, #tpu.memory_space<vmem>>, %arg6: memref<1xf32, #tpu.memory_space<smem>>, %arg7: memref<1x33x8xf32, #tpu.memory_space<vmem>>) attributes {dimension_semantics = [#tpu.dimension_semantics<parallel>], iteration_bounds = array<i64: 2>, scalar_prefetch = 0 : i64, scratch_operands = 0 : i64, tpu.core_type = #tpu.core_type<tc>, window_params = [{transform_indices = @transform_0, window_bounds = array<i64: 32, 128>}, {pipeline_mode = #tpu.pipeline_mode<synchronous>, transform_indices = @transform_1, window_bounds = array<i64: 4, 128, 128>}, {pipeline_mode = #tpu.pipeline_mode<synchronous>, transform_indices = @transform_2, window_bounds = array<i64: 4, 1, 128>}, {transform_indices = @transform_3, window_bounds = array<i64: 4>}, {pipeline_mode = #tpu.pipeline_mode<synchronous>, transform_indices = @transform_4, window_bounds = array<i64: 128, 16>}, {transform_indices = @transform_5, window_bounds = array<i64: 1>}, {transform_indices = @transform_6, window_bounds = array<i64: 1, 33, 8>}]} {
    %c0 = arith.constant 0 : index
    %c0_0 = arith.constant 0 : index
    %0 = vector.load %arg1[%c0, %c0_0] : memref<32x128xbf16, #tpu.memory_space<vmem>>, vector<32x128xbf16>
    %1 = tpu.iota {dimensions = array<i32: 0>} : vector<32x1xi32>
    %c32_i32 = arith.constant 32 : i32
    %c0_i32 = arith.constant 0 : i32
    %2 = arith.cmpi eq, %c32_i32, %c0_i32 : i32
    %c1_i32 = arith.constant 1 : i32
    %3 = arith.select %2, %c1_i32, %c32_i32 : i32
    %4 = vector.broadcast %3 : i32 to vector<32x1xi32>
    %5 = arith.remsi %1, %4 : vector<32x1xi32>
    %c0_i32_1 = arith.constant 0 : i32
    %6 = vector.broadcast %c0_i32_1 : i32 to vector<32x1xi32>
    %7 = arith.cmpi ne, %5, %6 : vector<32x1xi32>
    %c0_i32_2 = arith.constant 0 : i32
    %8 = vector.broadcast %c0_i32_2 : i32 to vector<32x1xi32>
    %9 = arith.cmpi slt, %5, %8 : vector<32x1xi32>
    %c0_i32_3 = arith.constant 0 : i32
    %10 = arith.cmpi slt, %3, %c0_i32_3 : i32
    %11 = vector.broadcast %10 : i1 to vector<32x1xi1>
    %12 = vector.broadcast %11 : vector<32x1xi1> to vector<32x1xi1>
    %13 = arith.xori %9, %12 : vector<32x1xi1>
    %14 = arith.andi %13, %7 : vector<32x1xi1>
    %15 = vector.broadcast %3 : i32 to vector<32x1xi32>
    %16 = arith.addi %5, %15 : vector<32x1xi32>
    %17 = arith.select %14, %16, %5 : vector<32x1xi1>, vector<32x1xi32>
    %18 = arith.extf %0 : vector<32x128xbf16> to vector<32x128xf32>
    %c24_i32 = arith.constant 24 : i32
    %19 = tpu.dynamic_rotate %18 by %c24_i32 dim 0 : vector<32x128xf32>, i32 -> vector<32x128xf32>
    %c8_i32 = arith.constant 8 : i32
    %20 = tpu.dynamic_rotate %18 by %c8_i32 dim 0 : vector<32x128xf32>, i32 -> vector<32x128xf32>
    %c24_i32_4 = arith.constant 24 : i32
    %21 = vector.broadcast %c24_i32_4 : i32 to vector<32x1xi32>
    %22 = arith.cmpi slt, %17, %21 : vector<32x1xi32>
    %cst = arith.constant 0.000000e+00 : f32
    %23 = vector.shape_cast %22 : vector<32x1xi1> to vector<32x1xi1>
    %24 = vector.broadcast %23 : vector<32x1xi1> to vector<32x128xi1>
    %25 = vector.broadcast %cst : f32 to vector<32x128xf32>
    %26 = arith.select %24, %19, %25 : vector<32x128xi1>, vector<32x128xf32>
    %c8_i32_5 = arith.constant 8 : i32
    %27 = vector.broadcast %c8_i32_5 : i32 to vector<32x1xi32>
    %28 = arith.cmpi sge, %17, %27 : vector<32x1xi32>
    %cst_6 = arith.constant 0.000000e+00 : f32
    %29 = vector.shape_cast %28 : vector<32x1xi1> to vector<32x1xi1>
    %30 = vector.broadcast %29 : vector<32x1xi1> to vector<32x128xi1>
    %31 = vector.broadcast %cst_6 : f32 to vector<32x128xf32>
    %32 = arith.select %30, %20, %31 : vector<32x128xi1>, vector<32x128xf32>
    %c16_i32 = arith.constant 16 : i32
    %33 = tpu.dynamic_rotate %18 by %c16_i32 dim 1 : vector<32x128xf32>, i32 -> vector<32x128xf32>
    %34 = arith.addf %26, %33 : vector<32x128xf32>
    %c32_i32_7 = arith.constant 32 : i32
    %35 = tpu.dynamic_rotate %32 by %c32_i32_7 dim 1 : vector<32x128xf32>, i32 -> vector<32x128xf32>
    %36 = arith.addf %34, %35 : vector<32x128xf32>
    %37 = arith.truncf %36 : vector<32x128xf32> to vector<32x128xbf16>
    %c0_8 = arith.constant 0 : index
    %c0_9 = arith.constant 0 : index
    %c0_10 = arith.constant 0 : index
    %38 = vector.load %arg2[%c0_8, %c0_9, %c0_10] : memref<4x128x128xbf16, #tpu.memory_space<vmem>>, vector<1x128x128xbf16>
    %39 = vector.shape_cast %38 : vector<1x128x128xbf16> to vector<128x128xbf16>
    %cst_11 = arith.constant dense<0.000000e+00> : vector<32x128xf32>
    %40 = tpu.matmul %37, %39, %cst_11 {dimension_numbers = #tpu.dot_dimension_numbers<[1], [0], [0], [1], [0, 0, 1, 1], [], []>} : vector<32x128xbf16>, vector<128x128xbf16>, vector<32x128xf32> -> vector<32x128xf32>
    %c0_12 = arith.constant 0 : index
    %c0_13 = arith.constant 0 : index
    %c0_14 = arith.constant 0 : index
    %41 = vector.load %arg3[%c0_12, %c0_13, %c0_14] : memref<4x1x128xf32, #tpu.memory_space<vmem>>, vector<1x1x128xf32>
    %42 = vector.shape_cast %41 : vector<1x1x128xf32> to vector<1x128xf32>
    %43 = vector.broadcast %42 : vector<1x128xf32> to vector<32x128xf32>
    %44 = arith.addf %40, %43 : vector<32x128xf32>
    %c0_15 = arith.constant 0 : index
    %45 = memref.load %arg4[%c0_15] : memref<4xf32, #tpu.memory_space<smem>>
    %cst_16 = arith.constant 0.000000e+00 : f32
    %46 = vector.broadcast %cst_16 : f32 to vector<32x128xf32>
    %47 = arith.cmpf ogt, %44, %46 : vector<32x128xf32>
    %48 = vector.broadcast %45 : f32 to vector<32x128xf32>
    %49 = arith.mulf %48, %44 : vector<32x128xf32>
    %50 = arith.select %47, %44, %49 : vector<32x128xi1>, vector<32x128xf32>
    %51 = arith.truncf %50 : vector<32x128xf32> to vector<32x128xbf16>
    %52 = arith.extf %51 : vector<32x128xbf16> to vector<32x128xf32>
    %c28_i32 = arith.constant 28 : i32
    %53 = tpu.dynamic_rotate %52 by %c28_i32 dim 0 : vector<32x128xf32>, i32 -> vector<32x128xf32>
    %c4_i32 = arith.constant 4 : i32
    %54 = tpu.dynamic_rotate %52 by %c4_i32 dim 0 : vector<32x128xf32>, i32 -> vector<32x128xf32>
    %c28_i32_17 = arith.constant 28 : i32
    %55 = vector.broadcast %c28_i32_17 : i32 to vector<32x1xi32>
    %56 = arith.cmpi slt, %17, %55 : vector<32x1xi32>
    %cst_18 = arith.constant 0.000000e+00 : f32
    %57 = vector.shape_cast %56 : vector<32x1xi1> to vector<32x1xi1>
    %58 = vector.broadcast %57 : vector<32x1xi1> to vector<32x128xi1>
    %59 = vector.broadcast %cst_18 : f32 to vector<32x128xf32>
    %60 = arith.select %58, %53, %59 : vector<32x128xi1>, vector<32x128xf32>
    %c4_i32_19 = arith.constant 4 : i32
    %61 = vector.broadcast %c4_i32_19 : i32 to vector<32x1xi32>
    %62 = arith.cmpi sge, %17, %61 : vector<32x1xi32>
    %cst_20 = arith.constant 0.000000e+00 : f32
    %63 = vector.shape_cast %62 : vector<32x1xi1> to vector<32x1xi1>
    %64 = vector.broadcast %63 : vector<32x1xi1> to vector<32x128xi1>
    %65 = vector.broadcast %cst_20 : f32 to vector<32x128xf32>
    %66 = arith.select %64, %54, %65 : vector<32x128xi1>, vector<32x128xf32>
    %c16_i32_21 = arith.constant 16 : i32
    %67 = tpu.dynamic_rotate %52 by %c16_i32_21 dim 1 : vector<32x128xf32>, i32 -> vector<32x128xf32>
    %68 = arith.addf %60, %67 : vector<32x128xf32>
    %c32_i32_22 = arith.constant 32 : i32
    %69 = tpu.dynamic_rotate %66 by %c32_i32_22 dim 1 : vector<32x128xf32>, i32 -> vector<32x128xf32>
    %70 = arith.addf %68, %69 : vector<32x128xf32>
    %71 = arith.truncf %70 : vector<32x128xf32> to vector<32x128xbf16>
    %c1 = arith.constant 1 : index
    %c0_23 = arith.constant 0 : index
    %c0_24 = arith.constant 0 : index
    %72 = vector.load %arg2[%c1, %c0_23, %c0_24] : memref<4x128x128xbf16, #tpu.memory_space<vmem>>, vector<1x128x128xbf16>
    %73 = vector.shape_cast %72 : vector<1x128x128xbf16> to vector<128x128xbf16>
    %cst_25 = arith.constant dense<0.000000e+00> : vector<32x128xf32>
    %74 = tpu.matmul %71, %73, %cst_25 {dimension_numbers = #tpu.dot_dimension_numbers<[1], [0], [0], [1], [0, 0, 1, 1], [], []>} : vector<32x128xbf16>, vector<128x128xbf16>, vector<32x128xf32> -> vector<32x128xf32>
    %c1_26 = arith.constant 1 : index
    %c0_27 = arith.constant 0 : index
    %c0_28 = arith.constant 0 : index
    %75 = vector.load %arg3[%c1_26, %c0_27, %c0_28] : memref<4x1x128xf32, #tpu.memory_space<vmem>>, vector<1x1x128xf32>
    %76 = vector.shape_cast %75 : vector<1x1x128xf32> to vector<1x128xf32>
    %77 = vector.broadcast %76 : vector<1x128xf32> to vector<32x128xf32>
    %78 = arith.addf %74, %77 : vector<32x128xf32>
    %c1_29 = arith.constant 1 : index
    %79 = memref.load %arg4[%c1_29] : memref<4xf32, #tpu.memory_space<smem>>
    %cst_30 = arith.constant 0.000000e+00 : f32
    %80 = vector.broadcast %cst_30 : f32 to vector<32x128xf32>
    %81 = arith.cmpf ogt, %78, %80 : vector<32x128xf32>
    %82 = vector.broadcast %79 : f32 to vector<32x128xf32>
    %83 = arith.mulf %82, %78 : vector<32x128xf32>
    %84 = arith.select %81, %78, %83 : vector<32x128xi1>, vector<32x128xf32>
    %85 = arith.truncf %84 : vector<32x128xf32> to vector<32x128xbf16>
    %86 = arith.extf %85 : vector<32x128xbf16> to vector<32x128xf32>
    %c30_i32 = arith.constant 30 : i32
    %87 = tpu.dynamic_rotate %86 by %c30_i32 dim 0 : vector<32x128xf32>, i32 -> vector<32x128xf32>
    %c2_i32 = arith.constant 2 : i32
    %88 = tpu.dynamic_rotate %86 by %c2_i32 dim 0 : vector<32x128xf32>, i32 -> vector<32x128xf32>
    %c30_i32_31 = arith.constant 30 : i32
    %89 = vector.broadcast %c30_i32_31 : i32 to vector<32x1xi32>
    %90 = arith.cmpi slt, %17, %89 : vector<32x1xi32>
    %cst_32 = arith.constant 0.000000e+00 : f32
    %91 = vector.shape_cast %90 : vector<32x1xi1> to vector<32x1xi1>
    %92 = vector.broadcast %91 : vector<32x1xi1> to vector<32x128xi1>
    %93 = vector.broadcast %cst_32 : f32 to vector<32x128xf32>
    %94 = arith.select %92, %87, %93 : vector<32x128xi1>, vector<32x128xf32>
    %c2_i32_33 = arith.constant 2 : i32
    %95 = vector.broadcast %c2_i32_33 : i32 to vector<32x1xi32>
    %96 = arith.cmpi sge, %17, %95 : vector<32x1xi32>
    %cst_34 = arith.constant 0.000000e+00 : f32
    %97 = vector.shape_cast %96 : vector<32x1xi1> to vector<32x1xi1>
    %98 = vector.broadcast %97 : vector<32x1xi1> to vector<32x128xi1>
    %99 = vector.broadcast %cst_34 : f32 to vector<32x128xf32>
    %100 = arith.select %98, %88, %99 : vector<32x128xi1>, vector<32x128xf32>
    %c16_i32_35 = arith.constant 16 : i32
    %101 = tpu.dynamic_rotate %86 by %c16_i32_35 dim 1 : vector<32x128xf32>, i32 -> vector<32x128xf32>
    %102 = arith.addf %94, %101 : vector<32x128xf32>
    %c32_i32_36 = arith.constant 32 : i32
    %103 = tpu.dynamic_rotate %100 by %c32_i32_36 dim 1 : vector<32x128xf32>, i32 -> vector<32x128xf32>
    %104 = arith.addf %102, %103 : vector<32x128xf32>
    %105 = arith.truncf %104 : vector<32x128xf32> to vector<32x128xbf16>
    %c2 = arith.constant 2 : index
    %c0_37 = arith.constant 0 : index
    %c0_38 = arith.constant 0 : index
    %106 = vector.load %arg2[%c2, %c0_37, %c0_38] : memref<4x128x128xbf16, #tpu.memory_space<vmem>>, vector<1x128x128xbf16>
    %107 = vector.shape_cast %106 : vector<1x128x128xbf16> to vector<128x128xbf16>
    %cst_39 = arith.constant dense<0.000000e+00> : vector<32x128xf32>
    %108 = tpu.matmul %105, %107, %cst_39 {dimension_numbers = #tpu.dot_dimension_numbers<[1], [0], [0], [1], [0, 0, 1, 1], [], []>} : vector<32x128xbf16>, vector<128x128xbf16>, vector<32x128xf32> -> vector<32x128xf32>
    %c2_40 = arith.constant 2 : index
    %c0_41 = arith.constant 0 : index
    %c0_42 = arith.constant 0 : index
    %109 = vector.load %arg3[%c2_40, %c0_41, %c0_42] : memref<4x1x128xf32, #tpu.memory_space<vmem>>, vector<1x1x128xf32>
    %110 = vector.shape_cast %109 : vector<1x1x128xf32> to vector<1x128xf32>
    %111 = vector.broadcast %110 : vector<1x128xf32> to vector<32x128xf32>
    %112 = arith.addf %108, %111 : vector<32x128xf32>
    %c2_43 = arith.constant 2 : index
    %113 = memref.load %arg4[%c2_43] : memref<4xf32, #tpu.memory_space<smem>>
    %cst_44 = arith.constant 0.000000e+00 : f32
    %114 = vector.broadcast %cst_44 : f32 to vector<32x128xf32>
    %115 = arith.cmpf ogt, %112, %114 : vector<32x128xf32>
    %116 = vector.broadcast %113 : f32 to vector<32x128xf32>
    %117 = arith.mulf %116, %112 : vector<32x128xf32>
    %118 = arith.select %115, %112, %117 : vector<32x128xi1>, vector<32x128xf32>
    %119 = arith.truncf %118 : vector<32x128xf32> to vector<32x128xbf16>
    %120 = arith.extf %119 : vector<32x128xbf16> to vector<32x128xf32>
    %c31_i32 = arith.constant 31 : i32
    %121 = tpu.dynamic_rotate %120 by %c31_i32 dim 0 : vector<32x128xf32>, i32 -> vector<32x128xf32>
    %c1_i32_45 = arith.constant 1 : i32
    %122 = tpu.dynamic_rotate %120 by %c1_i32_45 dim 0 : vector<32x128xf32>, i32 -> vector<32x128xf32>
    %c31_i32_46 = arith.constant 31 : i32
    %123 = vector.broadcast %c31_i32_46 : i32 to vector<32x1xi32>
    %124 = arith.cmpi slt, %17, %123 : vector<32x1xi32>
    %cst_47 = arith.constant 0.000000e+00 : f32
    %125 = vector.shape_cast %124 : vector<32x1xi1> to vector<32x1xi1>
    %126 = vector.broadcast %125 : vector<32x1xi1> to vector<32x128xi1>
    %127 = vector.broadcast %cst_47 : f32 to vector<32x128xf32>
    %128 = arith.select %126, %121, %127 : vector<32x128xi1>, vector<32x128xf32>
    %c1_i32_48 = arith.constant 1 : i32
    %129 = vector.broadcast %c1_i32_48 : i32 to vector<32x1xi32>
    %130 = arith.cmpi sge, %17, %129 : vector<32x1xi32>
    %cst_49 = arith.constant 0.000000e+00 : f32
    %131 = vector.shape_cast %130 : vector<32x1xi1> to vector<32x1xi1>
    %132 = vector.broadcast %131 : vector<32x1xi1> to vector<32x128xi1>
    %133 = vector.broadcast %cst_49 : f32 to vector<32x128xf32>
    %134 = arith.select %132, %122, %133 : vector<32x128xi1>, vector<32x128xf32>
    %c16_i32_50 = arith.constant 16 : i32
    %135 = tpu.dynamic_rotate %120 by %c16_i32_50 dim 1 : vector<32x128xf32>, i32 -> vector<32x128xf32>
    %136 = arith.addf %128, %135 : vector<32x128xf32>
    %c32_i32_51 = arith.constant 32 : i32
    %137 = tpu.dynamic_rotate %134 by %c32_i32_51 dim 1 : vector<32x128xf32>, i32 -> vector<32x128xf32>
    %138 = arith.addf %136, %137 : vector<32x128xf32>
    %139 = arith.truncf %138 : vector<32x128xf32> to vector<32x128xbf16>
    %c3 = arith.constant 3 : index
    %c0_52 = arith.constant 0 : index
    %c0_53 = arith.constant 0 : index
    %140 = vector.load %arg2[%c3, %c0_52, %c0_53] : memref<4x128x128xbf16, #tpu.memory_space<vmem>>, vector<1x128x128xbf16>
    %141 = vector.shape_cast %140 : vector<1x128x128xbf16> to vector<128x128xbf16>
    %cst_54 = arith.constant dense<0.000000e+00> : vector<32x128xf32>
    %142 = tpu.matmul %139, %141, %cst_54 {dimension_numbers = #tpu.dot_dimension_numbers<[1], [0], [0], [1], [0, 0, 1, 1], [], []>} : vector<32x128xbf16>, vector<128x128xbf16>, vector<32x128xf32> -> vector<32x128xf32>
    %c3_55 = arith.constant 3 : index
    %c0_56 = arith.constant 0 : index
    %c0_57 = arith.constant 0 : index
    %143 = vector.load %arg3[%c3_55, %c0_56, %c0_57] : memref<4x1x128xf32, #tpu.memory_space<vmem>>, vector<1x1x128xf32>
    %144 = vector.shape_cast %143 : vector<1x1x128xf32> to vector<1x128xf32>
    %145 = vector.broadcast %144 : vector<1x128xf32> to vector<32x128xf32>
    %146 = arith.addf %142, %145 : vector<32x128xf32>
    %c3_58 = arith.constant 3 : index
    %147 = memref.load %arg4[%c3_58] : memref<4xf32, #tpu.memory_space<smem>>
    %cst_59 = arith.constant 0.000000e+00 : f32
    %148 = vector.broadcast %cst_59 : f32 to vector<32x128xf32>
    %149 = arith.cmpf ogt, %146, %148 : vector<32x128xf32>
    %150 = vector.broadcast %147 : f32 to vector<32x128xf32>
    %151 = arith.mulf %150, %146 : vector<32x128xf32>
    %152 = arith.select %149, %146, %151 : vector<32x128xi1>, vector<32x128xf32>
    %153 = arith.truncf %152 : vector<32x128xf32> to vector<32x128xbf16>
    %c0_60 = arith.constant 0 : index
    %c0_61 = arith.constant 0 : index
    %154 = vector.load %arg5[%c0_60, %c0_61] : memref<128x16xbf16, #tpu.memory_space<vmem>>, vector<128x16xbf16>
    %cst_62 = arith.constant dense<0.000000e+00> : vector<32x16xf32>
    %155 = tpu.matmul %153, %154, %cst_62 {dimension_numbers = #tpu.dot_dimension_numbers<[1], [0], [0], [1], [0, 0, 1, 1], [], []>} : vector<32x128xbf16>, vector<128x16xbf16>, vector<32x16xf32> -> vector<32x16xf32>
    %c0_63 = arith.constant 0 : index
    %156 = memref.load %arg6[%c0_63] : memref<1xf32, #tpu.memory_space<smem>>
    %c1_i32_64 = arith.constant 1 : i32
    %157 = vector.broadcast %c1_i32_64 : i32 to vector<32x1xi32>
    %158 = arith.cmpi sge, %17, %157 : vector<32x1xi32>
    %c1_i32_65 = arith.constant 1 : i32
    %159 = tpu.dynamic_rotate %155 by %c1_i32_65 dim 0 : vector<32x16xf32>, i32 -> vector<32x16xf32>
    %cst_66 = arith.constant 0.000000e+00 : f32
    %160 = vector.shape_cast %158 : vector<32x1xi1> to vector<32x1xi1>
    %161 = vector.broadcast %160 : vector<32x1xi1> to vector<32x16xi1>
    %162 = vector.broadcast %cst_66 : f32 to vector<32x16xf32>
    %163 = arith.select %161, %159, %162 : vector<32x16xi1>, vector<32x16xf32>
    %164 = vector.extract_strided_slice %155 {offsets = [0, 0], sizes = [32, 8], strides = [1, 1]} : vector<32x16xf32> to vector<32x8xf32>
    %165 = vector.extract_strided_slice %163 {offsets = [0, 8], sizes = [32, 8], strides = [1, 1]} : vector<32x16xf32> to vector<32x8xf32>
    %166 = arith.addf %164, %165 : vector<32x8xf32>
    %167 = vector.broadcast %156 : f32 to vector<32x8xf32>
    %168 = arith.addf %166, %167 : vector<32x8xf32>
    %169 = vector.shape_cast %168 : vector<32x8xf32> to vector<1x32x8xf32>
    %c0_67 = arith.constant 0 : index
    %c0_68 = arith.constant 0 : index
    %c0_69 = arith.constant 0 : index
    %170 = vector.load %arg7[%c0_67, %c0_68, %c0_69] : memref<1x33x8xf32, #tpu.memory_space<vmem>>, vector<1x32x8xf32>
    tpu.vector_store %arg7[%c0_67, %c0_68, %c0_69], %169 {strides = array<i32>} : memref<1x33x8xf32, #tpu.memory_space<vmem>>, vector<1x32x8xf32>,
    %171 = vector.extract_strided_slice %155 {offsets = [0, 8], sizes = [32, 8], strides = [1, 1]} : vector<32x16xf32> to vector<32x8xf32>
    %172 = vector.shape_cast %171 : vector<32x8xf32> to vector<1x32x8xf32>
    %173 = vector.extract_strided_slice %172 {offsets = [0, 31, 0], sizes = [1, 1, 8], strides = [1, 1, 1]} : vector<1x32x8xf32> to vector<1x1x8xf32>
    %174 = vector.broadcast %156 : f32 to vector<1x1x8xf32>
    %175 = arith.addf %173, %174 : vector<1x1x8xf32>
    %c0_70 = arith.constant 0 : index
    %c32 = arith.constant 32 : index
    %c0_71 = arith.constant 0 : index
    %176 = vector.load %arg7[%c0_70, %c32, %c0_71] : memref<1x33x8xf32, #tpu.memory_space<vmem>>, vector<1x1x8xf32>
    tpu.vector_store %arg7[%c0_70, %c32, %c0_71], %175 {strides = array<i32>} : memref<1x33x8xf32, #tpu.memory_space<vmem>>, vector<1x1x8xf32>,
    return
  }
  func.func @transform_0(%arg0: i32) -> (i32, i32) {
    %c0_i32 = arith.constant 0 : i32
    %c0_i32_0 = arith.constant 0 : i32
    return %arg0, %c0_i32 : i32, i32
  }
  func.func @transform_1(%arg0: i32) -> (i32, i32, i32) {
    %c0_i32 = arith.constant 0 : i32
    %c0_i32_0 = arith.constant 0 : i32
    %c0_i32_1 = arith.constant 0 : i32
    %c0_i32_2 = arith.constant 0 : i32
    return %c0_i32, %c0_i32_0, %c0_i32_1 : i32, i32, i32
  }
  func.func @transform_2(%arg0: i32) -> (i32, i32, i32) {
    %c0_i32 = arith.constant 0 : i32
    %c0_i32_0 = arith.constant 0 : i32
    %c0_i32_1 = arith.constant 0 : i32
    %c0_i32_2 = arith.constant 0 : i32
    return %c0_i32, %c0_i32_0, %c0_i32_1 : i32, i32, i32
  }
  func.func @transform_3(%arg0: i32) -> i32 {
    %c0_i32 = arith.constant 0 : i32
    %c0_i32_0 = arith.constant 0 : i32
    return %c0_i32 : i32
  }
  func.func @transform_4(%arg0: i32) -> (i32, i32) {
    %c0_i32 = arith.constant 0 : i32
    %c0_i32_0 = arith.constant 0 : i32
    %c0_i32_1 = arith.constant 0 : i32
    return %c0_i32, %c0_i32_0 : i32, i32
  }
  func.func @transform_5(%arg0: i32) -> i32 {
    %c0_i32 = arith.constant 0 : i32
    %c0_i32_0 = arith.constant 0 : i32
    return %c0_i32 : i32
  }
  func.func @transform_6(%arg0: i32) -> (i32, i32, i32) {
    %c0_i32 = arith.constant 0 : i32
    %c0_i32_0 = arith.constant 0 : i32
    %c0_i32_1 = arith.constant 0 : i32
    return %arg0, %c0_i32, %c0_i32_0 : i32, i32, i32
  }
}

</mosaic_0001>

<llo_original>
// kernel: tpu_custom_call.1
$region0: #{tpu_custom_call.1}
  #allocation0 [shape = 'u32[]', space=smem, size = 0x4, offset = 0x4, fixed_abs, tag = 'smem constant byte address 0x4 - core index']
  #allocation1 [shape = 'u32[72,128]{1,0:T(1,128)}', space=vmem, size = 0x9000, scoped, tag = 'internal scratch']
  #allocation2 [shape = 'f32[1]{0:T(128)S(6)}', space=smem, size = 0x200, scoped, tag = 'scoped memory for tpu_custom_call.1']
  %s0 = inlined_call_operand.vmem [shape: bf16[64,128], index: 0, kind: input, shape index: {}]
  %s1 = inlined_call_operand.hbm [shape: bf16[4,128,128], index: 1, kind: input, shape index: {}]
  %s2 = inlined_call_operand.vmem [shape: f32[4,1,128], index: 2, kind: input, shape index: {}]
  %s3 = inlined_call_operand.vmem [shape: f32[4], index: 3, kind: input, shape index: {}]
  %s4 = inlined_call_operand.vmem [shape: bf16[128,16], index: 4, kind: input, shape index: {}]
  %s5 = inlined_call_operand.<no memory space> [shape: f32[1], index: 5, kind: input, shape index: {}]
  %s6 = inlined_call_operand.vmem [shape: f32[2,33,8], index: 6, kind: output, shape index: {}]
  %s7 = sld [smem:[#allocation0]]
  $region65: #{tpu_custom_call.1} parent=0
    _
  %s9 = ssub.s32 1, %s7
  %s10 = scalar_select 0, %s9, %s7
  %11 = sst [smem:[#allocation2]] %s5
  $region1: #{tpu_custom_call.1} parent=0
    #allocation3 [shape = 'u8[131072]{0}', space=vmem, size = 0x20000, scoped, tag = 'input window, operand 1, single buffered']
    #allocation4 [shape = 's32[2]{0}', space=sflag, size = 0x8, scoped, tag = 'scoped memory for tpu_custom_call.1']
    #allocation5 [shape = 's32[2]{0}', space=sflag, size = 0x8, scoped, tag = 'scoped memory for tpu_custom_call.1']
    #allocation6 [shape = 'u8[512]{0}', space=smem, size = 0x200, scoped, tag = 'input window, operand 3, single buffered']
    %12 = vsyncpa [#allocation4], 0
    %13 = vsyncpa [#allocation5], 0
    loop: start=0, step=1, limit=4
    $region2: #{tpu_custom_call.1} parent=1 // loop_pre_header
      _
    $region3: #{tpu_custom_call.1} parent=1 // loop_header
      %s15 = sphi 0, %s19
      %p16 = scmp.ge.s32.totalorder %s15, 4
      %s25 = sphi 0, %s27
      %s28 = sphi 0, %s25
      %s29 = sphi 0, %s28
      %s45 = sphi 0, %s29
      %s49 = sphi 0, %s49
      %s51 = sphi 0, %s49
      %s52 = sphi 0, %s51
      %s66 = sphi 0, %s52
      %s70 = sphi 0, %s70
      %s72 = sphi 0, %s70
      %s73 = sphi 0, %s72
      %s87 = sphi 0, %s73
      %s91 = sphi 0, %s91
      %s93 = sphi 0, %s91
      %s94 = sphi 0, %s93
      %s108 = sphi 0, %s94
      %s112 = sphi 0, %s112
      %s114 = sphi 0, %s112
      %s115 = sphi 0, %s114
      %s129 = sphi 0, %s115
      %s133 = sphi 0, %s133
      %s135 = sphi 0, %s133
      %s136 = sphi 0, %s135
      %s150 = sphi 0, %s136
      %s156 = sphi 0, %s158
      %s159 = sphi 0, %s156
      %s160 = sphi 0, %s159
      %s176 = sphi 0, %s160
    $region4: #{tpu_custom_call.1} parent=1 // loop_header_branch
      %18 = sbr.rel (%p16) target = $region8
    $region5: #{tpu_custom_call.1} parent=1 // loop_body
      %s20 = ssub.s32 %s15, 1
      %s21 = ssub.s32 %s15, 2
      %s22 = sadd.s32 %s15, 1
      %s23 = ssub.s32 %s15, %s22
      %p24 = scmp.eq.s32.totalorder %s23, 0
      %s26 = sadd.s32 %s25, 1
      %s27 = scalar_select %p24, %s25, %s26
      %p30 = pneg %p24
      %p31 = scmp.eq.s32.totalorder %s15, 1
      %p32 = por %p30, %p31
      %p33 = scmp.ne.s32.totalorder %s25, %s28
      %p34 = scmp.eq.s32.totalorder %s15, 0
      %p35 = por %p33, %p34
      %p36 = scmp.ne.s32.totalorder %s25, %s28
      %p37 = scmp.eq.s32.totalorder %s20, 1
      %p38 = por %p36, %p37
      %p39 = scmp.ne.s32.totalorder %s28, %s29
      %p40 = scmp.eq.s32.totalorder %s20, 0
      %p41 = por %p39, %p40
      %p42 = scmp.ne.s32.totalorder %s28, %s29
      %p43 = scmp.eq.s32.totalorder %s21, 1
      %p44 = por %p42, %p43
      %p46 = scmp.ne.s32.totalorder %s29, %s45
      %p47 = scmp.eq.s32.totalorder %s21, 0
      %p48 = por %p46, %p47
      %s50 = sadd.s32 %s49, 1
      %p53 = scmp.eq.s32.totalorder %s15, 1
      %p54 = scmp.ne.s32.totalorder %s49, %s51
      %p55 = scmp.eq.s32.totalorder %s15, 0
      %p56 = por %p54, %p55
      %p57 = scmp.ne.s32.totalorder %s49, %s51
      %p58 = scmp.eq.s32.totalorder %s20, 1
      %p59 = por %p57, %p58
      %p60 = scmp.ne.s32.totalorder %s51, %s52
      %p61 = scmp.eq.s32.totalorder %s20, 0
      %p62 = por %p60, %p61
      %p63 = scmp.ne.s32.totalorder %s51, %s52
      %p64 = scmp.eq.s32.totalorder %s21, 1
      %p65 = por %p63, %p64
      %p67 = scmp.ne.s32.totalorder %s52, %s66
      %p68 = scmp.eq.s32.totalorder %s21, 0
      %p69 = por %p67, %p68
      %s71 = sadd.s32 %s70, 1
      %p74 = scmp.eq.s32.totalorder %s15, 1
      %p75 = scmp.ne.s32.totalorder %s70, %s72
      %p76 = scmp.eq.s32.totalorder %s15, 0
      %p77 = por %p75, %p76
      %p78 = scmp.ne.s32.totalorder %s70, %s72
      %p79 = scmp.eq.s32.totalorder %s20, 1
      %p80 = por %p78, %p79
      %p81 = scmp.ne.s32.totalorder %s72, %s73
      %p82 = scmp.eq.s32.totalorder %s20, 0
      %p83 = por %p81, %p82
      %p84 = scmp.ne.s32.totalorder %s72, %s73
      %p85 = scmp.eq.s32.totalorder %s21, 1
      %p86 = por %p84, %p85
      %p88 = scmp.ne.s32.totalorder %s73, %s87
      %p89 = scmp.eq.s32.totalorder %s21, 0
      %p90 = por %p88, %p89
      %s92 = sadd.s32 %s91, 1
      %p95 = scmp.eq.s32.totalorder %s15, 1
      %p96 = scmp.ne.s32.totalorder %s91, %s93
      %p97 = scmp.eq.s32.totalorder %s15, 0
      %p98 = por %p96, %p97
      %p99 = scmp.ne.s32.totalorder %s91, %s93
      %p100 = scmp.eq.s32.totalorder %s20, 1
      %p101 = por %p99, %p100
      %p102 = scmp.ne.s32.totalorder %s93, %s94
      %p103 = scmp.eq.s32.totalorder %s20, 0
      %p104 = por %p102, %p103
      %p105 = scmp.ne.s32.totalorder %s93, %s94
      %p106 = scmp.eq.s32.totalorder %s21, 1
      %p107 = por %p105, %p106
      %p109 = scmp.ne.s32.totalorder %s94, %s108
      %p110 = scmp.eq.s32.totalorder %s21, 0
      %p111 = por %p109, %p110
      %s113 = sadd.s32 %s112, 1
      %p116 = scmp.eq.s32.totalorder %s15, 1
      %p117 = scmp.ne.s32.totalorder %s112, %s114
      %p118 = scmp.eq.s32.totalorder %s15, 0
      %p119 = por %p117, %p118
      %p120 = scmp.ne.s32.totalorder %s112, %s114
      %p121 = scmp.eq.s32.totalorder %s20, 1
      %p122 = por %p120, %p121
      %p123 = scmp.ne.s32.totalorder %s114, %s115
      %p124 = scmp.eq.s32.totalorder %s20, 0
      %p125 = por %p123, %p124
      %p126 = scmp.ne.s32.totalorder %s114, %s115
      %p127 = scmp.eq.s32.totalorder %s21, 1
      %p128 = por %p126, %p127
      %p130 = scmp.ne.s32.totalorder %s115, %s129
      %p131 = scmp.eq.s32.totalorder %s21, 0
      %p132 = por %p130, %p131
      %s134 = sadd.s32 %s133, 1
      %p137 = scmp.eq.s32.totalorder %s15, 1
      %p138 = scmp.ne.s32.totalorder %s133, %s135
      %p139 = scmp.eq.s32.totalorder %s15, 0
      %p140 = por %p138, %p139
      %p141 = scmp.ne.s32.totalorder %s133, %s135
      %p142 = scmp.eq.s32.totalorder %s20, 1
      %p143 = por %p141, %p142
      %p144 = scmp.ne.s32.totalorder %s135, %s136
      %p145 = scmp.eq.s32.totalorder %s20, 0
      %p146 = por %p144, %p145
      %p147 = scmp.ne.s32.totalorder %s135, %s136
      %p148 = scmp.eq.s32.totalorder %s21, 1
      %p149 = por %p147, %p148
      %p151 = scmp.ne.s32.totalorder %s136, %s150
      %p152 = scmp.eq.s32.totalorder %s21, 0
      %p153 = por %p151, %p152
      %s154 = ssub.s32 %s15, %s22
      %p155 = scmp.eq.s32.totalorder %s154, 0
      %s157 = sadd.s32 %s156, 1
      %s158 = scalar_select %p155, %s156, %s157
      %p161 = pneg %p155
      %p162 = scmp.eq.s32.totalorder %s15, 1
      %p163 = por %p161, %p162
      %p164 = scmp.ne.s32.totalorder %s156, %s159
      %p165 = scmp.eq.s32.totalorder %s15, 0
      %p166 = por %p164, %p165
      %p167 = scmp.ne.s32.totalorder %s156, %s159
      %p168 = scmp.eq.s32.totalorder %s20, 1
      %p169 = por %p167, %p168
      %p170 = scmp.ne.s32.totalorder %s159, %s160
      %p171 = scmp.eq.s32.totalorder %s20, 0
      %p172 = por %p170, %p171
      %p173 = scmp.ne.s32.totalorder %s159, %s160
      %p174 = scmp.eq.s32.totalorder %s21, 1
      %p175 = por %p173, %p174
      %p177 = scmp.ne.s32.totalorder %s160, %s176
      %p178 = scmp.eq.s32.totalorder %s21, 0
      %p179 = por %p177, %p178
      %p180 = scmp.le.s32.totalorder 1, %s15
      %p181 = scmp.lt.s32.totalorder %s15, 3
      %p182 = pnand %p180, %p181
      %p183 = pneg %p182
      // Predicated region
      $region9: #{tpu_custom_call.1} parent=5 // pred_check
        _
      $region10: #{tpu_custom_call.1} parent=5 // pred_check_branch
        %185 = sbr.rel (%p182) target = $region12
      $region11: #{tpu_custom_call.1} parent=5 // pred_region
        %s186 = ssub.s32 %s15, 1
        // Predicated region
        $region13: #{tpu_custom_call.1} parent=11 // pred_check
          %p187 = pneg %p62
        $region14: #{tpu_custom_call.1} parent=11 // pred_check_branch
          %189 = sbr.rel (%p187) target = $region16
        $region15: #{tpu_custom_call.1} parent=11 // pred_region
          %191 = vsyncadd [#allocation4], 0
          %s192 = sshll.u32 %s1, 4
          %s193 = int_to_ptr.hbm [resolvable:$true] %s192
          %s194 = sshll.u32 [#allocation3], 4
          %s195 = int_to_ptr.vmem [resolvable:$true] %s194
          %200 = dma.hbm_to_vmem [thread:$0]  %s193, 4096, %s195, [#allocation4], 64, 64, 4
        $region16: #{tpu_custom_call.1} parent=11 // pred_fallthru
          _
        // Predicated region
        $region17: #{tpu_custom_call.1} parent=11 // pred_check
          %p201 = pneg %p83
        $region18: #{tpu_custom_call.1} parent=11 // pred_check_branch
          %203 = sbr.rel (%p201) target = $region20
        $region19: #{tpu_custom_call.1} parent=11 // pred_region
          _
        $region20: #{tpu_custom_call.1} parent=11 // pred_fallthru
          _
        // Predicated region
        $region21: #{tpu_custom_call.1} parent=11 // pred_check
          %p204 = pneg %p104
        $region22: #{tpu_custom_call.1} parent=11 // pred_check_branch
          %206 = sbr.rel (%p204) target = $region24
        $region23: #{tpu_custom_call.1} parent=11 // pred_region
          %208 = vsyncadd [#allocation5], 0
          %s210 = sshll.u32 %s3, 4
          %s211 = int_to_ptr.vmem [resolvable:$true] %s210
          %213 = dma.vmem_to_smem %s211, 16, [#allocation6], [#allocation5]
        $region24: #{tpu_custom_call.1} parent=11 // pred_fallthru
          _
        // Predicated region
        $region25: #{tpu_custom_call.1} parent=11 // pred_check
          %p214 = pneg %p125
        $region26: #{tpu_custom_call.1} parent=11 // pred_check_branch
          %216 = sbr.rel (%p214) target = $region28
        $region27: #{tpu_custom_call.1} parent=11 // pred_region
          _
        $region28: #{tpu_custom_call.1} parent=11 // pred_fallthru
          _
        // Predicated region
        $region29: #{tpu_custom_call.1} parent=11 // pred_check
          %p217 = pneg %p146
        $region30: #{tpu_custom_call.1} parent=11 // pred_check_branch
          %219 = sbr.rel (%p217) target = $region32
        $region31: #{tpu_custom_call.1} parent=11 // pred_region
          _
        $region32: #{tpu_custom_call.1} parent=11 // pred_fallthru
          _
      $region12: #{tpu_custom_call.1} parent=5 // pred_fallthru
        _
      %p220 = scmp.lt.s32.totalorder %s15, 2
      // Predicated region
      $region33: #{tpu_custom_call.1} parent=5 // pred_check
        %p221 = pneg %p220
      $region34: #{tpu_custom_call.1} parent=5 // pred_check_branch
        %223 = sbr.rel (%p221) target = $region36
      $region35: #{tpu_custom_call.1} parent=5 // pred_region
        // Predicated region
        $region37: #{tpu_custom_call.1} parent=35 // pred_check
          %p224 = pneg %p35
        $region38: #{tpu_custom_call.1} parent=35 // pred_check_branch
          %226 = sbr.rel (%p224) target = $region40
        $region39: #{tpu_custom_call.1} parent=35 // pred_region
          %s227 = smul.u32 4, %s15
          %p228 = scmp.lt.s32.totalorder %s227, 7
          %s229 = scalar_select %p228, %s227, 7
          %s230 = smul.addr %s229, 4
          %s231 = scalar_lea.vmem %s0, %s230
          %s232 = smul.u32 4, %s15
        $region40: #{tpu_custom_call.1} parent=35 // pred_fallthru
          _
      $region36: #{tpu_custom_call.1} parent=5 // pred_fallthru
        _
      %p233 = scmp.le.s32.totalorder 1, %s15
      %p234 = scmp.lt.s32.totalorder %s15, 3
      %p235 = pnand %p233, %p234
      %p236 = pneg %p235
      // Predicated region
      $region41: #{tpu_custom_call.1} parent=5 // pred_check
        _
      $region42: #{tpu_custom_call.1} parent=5 // pred_check_branch
        %238 = sbr.rel (%p235) target = $region44
      $region43: #{tpu_custom_call.1} parent=5 // pred_region
        %s239 = ssub.s32 %s15, 1
        // Predicated region
        $region45: #{tpu_custom_call.1} parent=43 // pred_check
          %p240 = pneg %p62
        $region46: #{tpu_custom_call.1} parent=43 // pred_check_branch
          %242 = sbr.rel (%p240) target = $region48
        $region47: #{tpu_custom_call.1} parent=43 // pred_region
          %244 = dma.done [#allocation4], 4096
        $region48: #{tpu_custom_call.1} parent=43 // pred_fallthru
          _
        // Predicated region
        $region49: #{tpu_custom_call.1} parent=43 // pred_check
          %p245 = pneg %p104
        $region50: #{tpu_custom_call.1} parent=43 // pred_check_branch
          %247 = sbr.rel (%p245) target = $region52
        $region51: #{tpu_custom_call.1} parent=43 // pred_region
          %249 = dma.done [#allocation5], 16
        $region52: #{tpu_custom_call.1} parent=43 // pred_fallthru
          _
        %250 = sfence
        %s251 = smul.u32 4, %s20
        %p252 = scmp.lt.s32.totalorder %s251, 7
        %s253 = scalar_select %p252, %s251, 7
        %s254 = smul.addr %s253, 4
        %s255 = scalar_lea.vmem %s0, %s254
        %p256 = pneg %p41
        %p257 = pneg %p38
        %p258 = pneg %p62
        %p259 = pneg %p59
        %p260 = pneg %p83
        %p261 = pneg %p80
        %p262 = pneg %p104
        %p263 = pneg %p101
        %p264 = pneg %p125
        %p265 = pneg %p122
        %p266 = pneg %p146
        %p267 = pneg %p143
        %p268 = pneg %p172
        %p269 = pneg %p169
        %p270 = scmp.lt.s32.totalorder %s20, 1
        %s271 = scalar_select %p270, %s20, 1
        %s272 = smul.addr %s271, 5
        %s273 = smul.addr %s272, 8
        %s274 = scalar_lea.vmem %s6, %s273
        %s275 = smul.u32 4, %s20
        %p276 = scmp.lt.s32.totalorder %s275, 7
        %s277 = scalar_select %p276, %s275, 7
        %s278 = smul.addr %s277, 4
        %s279 = scalar_lea.vmem %s0, %s278
        %s280 = smul.u32 4, %s20
        %p281 = scmp.lt.s32.totalorder %s20, 1
        %s282 = scalar_select %p281, %s20, 1
        %s283 = smul.addr %s282, 5
        %s284 = smul.addr %s283, 8
        %s285 = scalar_lea.vmem %s6, %s284
        %v286 = vld [vmem:[%s279] sm:$0xf]
        %v287 = vld [vmem:[%s279 + $0x4] sm:$0xf]
        %v288 = vld [vmem:[%s279 + $0x8] sm:$0xf]
        %v289 = vld [vmem:[%s279 + $0xc] sm:$0xf]
        %v290 = vlaneseq
        %v291 = vshrl.u32 %v290, 7
        %v292 = vadd.s32 %v291, 8
        %v293 = vadd.s32 %v291, 16
        %v294 = vadd.s32 %v291, 24
        %vm295 = vcmp.lt.s32.totalorder %v291, 0
        %v296 = vsub.s32 0, %v291
        %v297 = vsel %vm295, %v296, %v291
        %v298 = vshrl.u32 %v297, 5
        %v299 = vand.u32 %v297, 31
        %v300 = vsub.s32 0, %v299
        %v301 = vsel %vm295, %v300, %v299
        %vm302 = vcmp.lt.s32.totalorder %v292, 0
        %v303 = vsub.s32 0, %v292
        %v304 = vsel %vm302, %v303, %v292
        %v305 = vshrl.u32 %v304, 5
        %v306 = vand.u32 %v304, 31
        %v307 = vsub.s32 0, %v306
        %v308 = vsel %vm302, %v307, %v306
        %vm309 = vcmp.lt.s32.totalorder %v293, 0
        %v310 = vsub.s32 0, %v293
        %v311 = vsel %vm309, %v310, %v293
        %v312 = vshrl.u32 %v311, 5
        %v313 = vand.u32 %v311, 31
        %v314 = vsub.s32 0, %v313
        %v315 = vsel %vm309, %v314, %v313
        %vm316 = vcmp.lt.s32.totalorder %v294, 0
        %v317 = vsub.s32 0, %v294
        %v318 = vsel %vm316, %v317, %v294
        %v319 = vshrl.u32 %v318, 5
        %v320 = vand.u32 %v318, 31
        %v321 = vsub.s32 0, %v320
        %v322 = vsel %vm316, %v321, %v320
        %vm323 = vcmp.ne.s32.totalorder %v301, 0
        %vm324 = vcmp.ne.s32.totalorder %v308, 0
        %vm325 = vcmp.ne.s32.totalorder %v315, 0
        %vm326 = vcmp.ne.s32.totalorder %v322, 0
        %vm327 = vcmp.lt.s32.totalorder %v301, 0
        %vm328 = vcmp.lt.s32.totalorder %v308, 0
        %vm329 = vcmp.lt.s32.totalorder %v315, 0
        %vm330 = vcmp.lt.s32.totalorder %v322, 0
        %vm331 = vmand %vm327, %vm323
        %vm332 = vmand %vm328, %vm324
        %vm333 = vmand %vm329, %vm325
        %vm334 = vmand %vm330, %vm326
        %v335 = vadd.s32 %v301, 32
        %v336 = vadd.s32 %v308, 32
        %v337 = vadd.s32 %v315, 32
        %v338 = vadd.s32 %v322, 32
        %v339 = vsel %vm331, %v335, %v301
        %v340 = vsel %vm332, %v336, %v308
        %v341 = vsel %vm333, %v337, %v315
        %v342 = vsel %vm334, %v338, %v322
        %v343 = vunpack.c.l.bf16 %v286
        %v344 = vunpack.c.l.bf16 %v287
        %v345 = vunpack.c.l.bf16 %v288
        %v346 = vunpack.c.l.bf16 %v289
        %vm347 = vcmp.lt.s32.totalorder %v339, 24
        %vm348 = vcmp.lt.s32.totalorder %v340, 24
        %vm349 = vcmp.lt.s32.totalorder %v341, 24
        %vm350 = vcmp.lt.s32.totalorder %v342, 24
        %v351 = vsel %vm347, 1, 0
        %v352 = vsel %vm348, 1, 0
        %v353 = vsel %vm349, 1, 0
        %v354 = vsel %vm350, 1, 0
        %vm355 = vcmp.eq.s32.totalorder %v351, 1
        %vm356 = vcmp.eq.s32.totalorder %v352, 1
        %vm357 = vcmp.eq.s32.totalorder %v353, 1
        %vm358 = vcmp.eq.s32.totalorder %v354, 1
        %v359 = vsel %vm355, %v344, 0.0
        %v360 = vsel %vm356, %v345, 0.0
        %v361 = vsel %vm357, %v346, 0.0
        %v362 = vsel %vm358, %v343, 0.0
        %vm363 = vcmp.ge.s32.totalorder %v339, 8
        %vm364 = vcmp.ge.s32.totalorder %v340, 8
        %vm365 = vcmp.ge.s32.totalorder %v341, 8
        %vm366 = vcmp.ge.s32.totalorder %v342, 8
        %v367 = vsel %vm363, 1, 0
        %v368 = vsel %vm364, 1, 0
        %v369 = vsel %vm365, 1, 0
        %v370 = vsel %vm366, 1, 0
        %vm371 = vcmp.eq.s32.totalorder %v367, 1
        %vm372 = vcmp.eq.s32.totalorder %v368, 1
        %vm373 = vcmp.eq.s32.totalorder %v369, 1
        %vm374 = vcmp.eq.s32.totalorder %v370, 1
        %v375 = vsel %vm371, %v346, 0.0
        %v376 = vsel %vm372, %v343, 0.0
        %v377 = vsel %vm373, %v344, 0.0
        %v378 = vsel %vm374, %v345, 0.0
        %379 = vrot.lane.b32.xlu0 %v343, 16
        %v380 = vpop.permute.xlu0 %379
        %381 = vrot.lane.b32.xlu0 %v344, 16
        %v382 = vpop.permute.xlu0 %381
        %383 = vrot.lane.b32.xlu0 %v345, 16
        %v384 = vpop.permute.xlu0 %383
        %385 = vrot.lane.b32.xlu0 %v346, 16
        %v386 = vpop.permute.xlu0 %385
        %v387 = vadd.f32 %v359, %v380
        %v388 = vadd.f32 %v360, %v382
        %v389 = vadd.f32 %v361, %v384
        %v390 = vadd.f32 %v362, %v386
        %391 = vrot.lane.b32.xlu0 %v375, 32
        %v392 = vpop.permute.xlu0 %391
        %393 = vrot.lane.b32.xlu0 %v376, 32
        %v394 = vpop.permute.xlu0 %393
        %395 = vrot.lane.b32.xlu0 %v377, 32
        %v396 = vpop.permute.xlu0 %395
        %397 = vrot.lane.b32.xlu0 %v378, 32
        %v398 = vpop.permute.xlu0 %397
        %v399 = vadd.f32 %v387, %v392
        %v400 = vadd.f32 %v388, %v394
        %v401 = vadd.f32 %v389, %v396
        %v402 = vadd.f32 %v390, %v398
        %v403 = vpack.c.bf16 %v400, %v399
        %v404 = vpack.c.bf16 %v402, %v401
        %v405 = vld [vmem:[#allocation3] sm:$0xf]
        %v406 = vld [vmem:[#allocation3 + $0x4] sm:$0xf]
        %v407 = vld [vmem:[#allocation3 + $0x8] sm:$0xf]
        %v408 = vld [vmem:[#allocation3 + $0xc] sm:$0xf]
        %v409 = vld [vmem:[#allocation3 + $0x10] sm:$0xf]
        %v410 = vld [vmem:[#allocation3 + $0x14] sm:$0xf]
        %v411 = vld [vmem:[#allocation3 + $0x18] sm:$0xf]
        %v412 = vld [vmem:[#allocation3 + $0x1c] sm:$0xf]
        %v413 = vld [vmem:[#allocation3 + $0x20] sm:$0xf]
        %v414 = vld [vmem:[#allocation3 + $0x24] sm:$0xf]
        %v415 = vld [vmem:[#allocation3 + $0x28] sm:$0xf]
        %v416 = vld [vmem:[#allocation3 + $0x2c] sm:$0xf]
        %v417 = vld [vmem:[#allocation3 + $0x30] sm:$0xf]
        %v418 = vld [vmem:[#allocation3 + $0x34] sm:$0xf]
        %v419 = vld [vmem:[#allocation3 + $0x38] sm:$0xf]
        %v420 = vld [vmem:[#allocation3 + $0x3c] sm:$0xf]
        %v421 = vld [vmem:[%s2] sm:$0x1]
        %v423 = vperm.slane %v421, 0
        %v441 = vunpack.c.l.b16 %v405
        %v442 = vunpack.c.l.b16 %v406
        %v443 = vunpack.c.l.b16 %v407
        %v444 = vunpack.c.l.b16 %v408
        %v445 = vunpack.c.l.b16 %v409
        %v446 = vunpack.c.l.b16 %v410
        %v447 = vunpack.c.l.b16 %v411
        %v448 = vunpack.c.l.b16 %v412
        %v449 = vunpack.c.l.b16 %v413
        %v450 = vunpack.c.l.b16 %v414
        %v451 = vunpack.c.l.b16 %v415
        %v452 = vunpack.c.l.b16 %v416
        %v453 = vunpack.c.l.b16 %v417
        %v454 = vunpack.c.l.b16 %v418
        %v455 = vunpack.c.l.b16 %v419
        %v456 = vunpack.c.l.b16 %v420
        %v457 = vpack.c.b16 %v442, %v441
        %v458 = vpack.c.b16 %v444, %v443
        %v459 = vpack.c.b16 %v446, %v445
        %v460 = vpack.c.b16 %v448, %v447
        %v461 = vpack.c.b16 %v450, %v449
        %v462 = vpack.c.b16 %v452, %v451
        %v463 = vpack.c.b16 %v454, %v453
        %v464 = vpack.c.b16 %v456, %v455
        %473 = vmatpush.bf16.msra.mxu0 %v464
        %474 = vmatpush.bf16.msra.mxu0 %v463
        %475 = vmatpush.bf16.msra.mxu0 %v462
        %476 = vmatpush.bf16.msra.mxu0 %v461
        %477 = vmatpush.bf16.msra.mxu0 %v460
        %478 = vmatpush.bf16.msra.mxu0 %v459
        %479 = vmatpush.bf16.msra.mxu0 %v458
        %480 = vmatpush.bf16.msra.mxu0 %v457
        %481 = vmatmul.bf16.gmra.mxu0 %v403
        %v482 = vpop.f32.mrf.mxu0
        %v483 = vadd.f32 %v423, %v482
        %v484 = vpop.f32.mrf.mxu0
        %v485 = vadd.f32 %v423, %v484
        %486 = vmatmul.bf16.gmra.mxu0 %v404
        %v487 = vpop.f32.mrf.mxu0
        %v488 = vadd.f32 %v423, %v487
        %v489 = vpop.f32.mrf.mxu0
        %v490 = vadd.f32 %v423, %v489
        %491 = vdwg.mxu0
        %s492 = sld [smem:[#allocation6]]
        %vm493 = vcmp.gt.f32.partialorder %v483, 0.0
        %vm494 = vcmp.gt.f32.partialorder %v485, 0.0
        %vm495 = vcmp.gt.f32.partialorder %v488, 0.0
        %vm496 = vcmp.gt.f32.partialorder %v490, 0.0
        %v497 = vstv %s492
        %v498 = vmul.f32 %v497, %v483
        %v499 = vmul.f32 %v497, %v485
        %v500 = vmul.f32 %v497, %v488
        %v501 = vmul.f32 %v497, %v490
        %v502 = vsel %vm493, %v483, %v498
        %v503 = vsel %vm494, %v485, %v499
        %v504 = vsel %vm495, %v488, %v500
        %v505 = vsel %vm496, %v490, %v501
        %v506 = vpack.c.bf16 %v502, %v502
        %v507 = vpack.c.bf16 %v503, %v503
        %v508 = vpack.c.bf16 %v504, %v504
        %v509 = vpack.c.bf16 %v505, %v505
        %v510 = vunpack.c.l.bf16 %v506
        %v511 = vunpack.c.l.bf16 %v507
        %v512 = vunpack.c.l.bf16 %v508
        %v513 = vunpack.c.l.bf16 %v509
        %v514 = vrot.slane %v510, 4
        %v515 = vrot.slane %v511, 4
        %v516 = vrot.slane %v512, 4
        %v517 = vrot.slane %v513, 4
        %vm518 = vcmp.lt.s32.totalorder %v291, 4
        %v519 = vsel %vm518, %v516, %v517
        %v520 = vsel %vm518, %v515, %v516
        %v521 = vsel %vm518, %v514, %v515
        %v522 = vsel %vm518, %v517, %v514
        %vm523 = vcmp.lt.s32.totalorder %v339, 28
        %vm524 = vcmp.lt.s32.totalorder %v340, 28
        %vm525 = vcmp.lt.s32.totalorder %v341, 28
        %vm526 = vcmp.lt.s32.totalorder %v342, 28
        %v527 = vsel %vm523, 1, 0
        %v528 = vsel %vm524, 1, 0
        %v529 = vsel %vm525, 1, 0
        %v530 = vsel %vm526, 1, 0
        %vm531 = vcmp.eq.s32.totalorder %v527, 1
        %vm532 = vcmp.eq.s32.totalorder %v528, 1
        %vm533 = vcmp.eq.s32.totalorder %v529, 1
        %vm534 = vcmp.eq.s32.totalorder %v530, 1
        %v535 = vsel %vm531, %v521, 0.0
        %v536 = vsel %vm532, %v520, 0.0
        %v537 = vsel %vm533, %v519, 0.0
        %v538 = vsel %vm534, %v522, 0.0
        %vm539 = vcmp.ge.s32.totalorder %v339, 4
        %vm540 = vcmp.ge.s32.totalorder %v340, 4
        %vm541 = vcmp.ge.s32.totalorder %v341, 4
        %vm542 = vcmp.ge.s32.totalorder %v342, 4
        %v543 = vsel %vm539, 1, 0
        %v544 = vsel %vm540, 1, 0
        %v545 = vsel %vm541, 1, 0
        %v546 = vsel %vm542, 1, 0
        %vm547 = vcmp.eq.s32.totalorder %v543, 1
        %vm548 = vcmp.eq.s32.totalorder %v544, 1
        %vm549 = vcmp.eq.s32.totalorder %v545, 1
        %vm550 = vcmp.eq.s32.totalorder %v546, 1
        %v551 = vsel %vm547, %v522, 0.0
        %v552 = vsel %vm548, %v521, 0.0
        %v553 = vsel %vm549, %v520, 0.0
        %v554 = vsel %vm550, %v519, 0.0
        %555 = vrot.lane.b32.xlu0 %v510, 16
        %v556 = vpop.permute.xlu0 %555
        %557 = vrot.lane.b32.xlu0 %v511, 16
        %v558 = vpop.permute.xlu0 %557
        %559 = vrot.lane.b32.xlu0 %v512, 16
        %v560 = vpop.permute.xlu0 %559
        %561 = vrot.lane.b32.xlu0 %v513, 16
        %v562 = vpop.permute.xlu0 %561
        %v563 = vadd.f32 %v535, %v556
        %v564 = vadd.f32 %v536, %v558
        %v565 = vadd.f32 %v537, %v560
        %v566 = vadd.f32 %v538, %v562
        %567 = vrot.lane.b32.xlu0 %v551, 32
        %v568 = vpop.permute.xlu0 %567
        %569 = vrot.lane.b32.xlu0 %v552, 32
        %v570 = vpop.permute.xlu0 %569
        %571 = vrot.lane.b32.xlu0 %v553, 32
        %v572 = vpop.permute.xlu0 %571
        %573 = vrot.lane.b32.xlu0 %v554, 32
        %v574 = vpop.permute.xlu0 %573
        %v575 = vadd.f32 %v563, %v568
        %v576 = vadd.f32 %v564, %v570
        %v577 = vadd.f32 %v565, %v572
        %v578 = vadd.f32 %v566, %v574
        %v579 = vpack.c.bf16 %v576, %v575
        %v580 = vpack.c.bf16 %v578, %v577
        %s581 = scalar_lea.vmem [#allocation3], 64
        %v582 = vld [vmem:[%s581] sm:$0xf]
        %v583 = vld [vmem:[%s581 + $0x4] sm:$0xf]
        %v584 = vld [vmem:[%s581 + $0x8] sm:$0xf]
        %v585 = vld [vmem:[%s581 + $0xc] sm:$0xf]
        %v586 = vld [vmem:[%s581 + $0x10] sm:$0xf]
        %v587 = vld [vmem:[%s581 + $0x14] sm:$0xf]
        %v588 = vld [vmem:[%s581 + $0x18] sm:$0xf]
        %v589 = vld [vmem:[%s581 + $0x1c] sm:$0xf]
        %v590 = vld [vmem:[%s581 + $0x20] sm:$0xf]
        %v591 = vld [vmem:[%s581 + $0x24] sm:$0xf]
        %v592 = vld [vmem:[%s581 + $0x28] sm:$0xf]
        %v593 = vld [vmem:[%s581 + $0x2c] sm:$0xf]
        %v594 = vld [vmem:[%s581 + $0x30] sm:$0xf]
        %v595 = vld [vmem:[%s581 + $0x34] sm:$0xf]
        %v596 = vld [vmem:[%s581 + $0x38] sm:$0xf]
        %v597 = vld [vmem:[%s581 + $0x3c] sm:$0xf]
        %s598 = scalar_lea.vmem %s2, 1
        %v599 = vld [vmem:[%s598] sm:$0x1]
        %v601 = vperm.slane %v599, 0
        %v619 = vunpack.c.l.b16 %v582
        %v620 = vunpack.c.l.b16 %v583
        %v621 = vunpack.c.l.b16 %v584
        %v622 = vunpack.c.l.b16 %v585
        %v623 = vunpack.c.l.b16 %v586
        %v624 = vunpack.c.l.b16 %v587
        %v625 = vunpack.c.l.b16 %v588
        %v626 = vunpack.c.l.b16 %v589
        %v627 = vunpack.c.l.b16 %v590
        %v628 = vunpack.c.l.b16 %v591
        %v629 = vunpack.c.l.b16 %v592
        %v630 = vunpack.c.l.b16 %v593
        %v631 = vunpack.c.l.b16 %v594
        %v632 = vunpack.c.l.b16 %v595
        %v633 = vunpack.c.l.b16 %v596
        %v634 = vunpack.c.l.b16 %v597
        %v635 = vpack.c.b16 %v620, %v619
        %v636 = vpack.c.b16 %v622, %v621
        %v637 = vpack.c.b16 %v624, %v623
        %v638 = vpack.c.b16 %v626, %v625
        %v639 = vpack.c.b16 %v628, %v627
        %v640 = vpack.c.b16 %v630, %v629
        %v641 = vpack.c.b16 %v632, %v631
        %v642 = vpack.c.b16 %v634, %v633
        %651 = vmatpush.bf16.msra.mxu0 %v642
        %652 = vmatpush.bf16.msra.mxu0 %v641
        %653 = vmatpush.bf16.msra.mxu0 %v640
        %654 = vmatpush.bf16.msra.mxu0 %v639
        %655 = vmatpush.bf16.msra.mxu0 %v638
        %656 = vmatpush.bf16.msra.mxu0 %v637
        %657 = vmatpush.bf16.msra.mxu0 %v636
        %658 = vmatpush.bf16.msra.mxu0 %v635
        %659 = vmatmul.bf16.gmra.mxu0 %v579
        %v660 = vpop.f32.mrf.mxu0
        %v661 = vadd.f32 %v601, %v660
        %v662 = vpop.f32.mrf.mxu0
        %v663 = vadd.f32 %v601, %v662
        %664 = vmatmul.bf16.gmra.mxu0 %v580
        %v665 = vpop.f32.mrf.mxu0
        %v666 = vadd.f32 %v601, %v665
        %v667 = vpop.f32.mrf.mxu0
        %v668 = vadd.f32 %v601, %v667
        %669 = vdwg.mxu0
        %s670 = sld [smem:[#allocation6 + $0x1]]
        %vm671 = vcmp.gt.f32.partialorder %v661, 0.0
        %vm672 = vcmp.gt.f32.partialorder %v663, 0.0
        %vm673 = vcmp.gt.f32.partialorder %v666, 0.0
        %vm674 = vcmp.gt.f32.partialorder %v668, 0.0
        %v675 = vstv %s670
        %v676 = vmul.f32 %v675, %v661
        %v677 = vmul.f32 %v675, %v663
        %v678 = vmul.f32 %v675, %v666
        %v679 = vmul.f32 %v675, %v668
        %v680 = vsel %vm671, %v661, %v676
        %v681 = vsel %vm672, %v663, %v677
        %v682 = vsel %vm673, %v666, %v678
        %v683 = vsel %vm674, %v668, %v679
        %v684 = vpack.c.bf16 %v680, %v680
        %v685 = vpack.c.bf16 %v681, %v681
        %v686 = vpack.c.bf16 %v682, %v682
        %v687 = vpack.c.bf16 %v683, %v683
        %v688 = vunpack.c.l.bf16 %v684
        %v689 = vunpack.c.l.bf16 %v685
        %v690 = vunpack.c.l.bf16 %v686
        %v691 = vunpack.c.l.bf16 %v687
        %v692 = vrot.slane %v688, 2
        %v693 = vrot.slane %v689, 2
        %v694 = vrot.slane %v690, 2
        %v695 = vrot.slane %v691, 2
        %vm696 = vcmp.lt.s32.totalorder %v291, 6
        %v697 = vsel %vm696, %v694, %v695
        %v698 = vsel %vm696, %v693, %v694
        %v699 = vsel %vm696, %v692, %v693
        %v700 = vsel %vm696, %v695, %v692
        %v701 = vrot.slane %v688, 6
        %v702 = vrot.slane %v689, 6
        %v703 = vrot.slane %v690, 6
        %v704 = vrot.slane %v691, 6
        %vm705 = vcmp.lt.s32.totalorder %v291, 2
        %v706 = vsel %vm705, %v703, %v704
        %v707 = vsel %vm705, %v702, %v703
        %v708 = vsel %vm705, %v701, %v702
        %v709 = vsel %vm705, %v704, %v701
        %vm710 = vcmp.lt.s32.totalorder %v339, 30
        %vm711 = vcmp.lt.s32.totalorder %v340, 30
        %vm712 = vcmp.lt.s32.totalorder %v341, 30
        %vm713 = vcmp.lt.s32.totalorder %v342, 30
        %v714 = vsel %vm710, 1, 0
        %v715 = vsel %vm711, 1, 0
        %v716 = vsel %vm712, 1, 0
        %v717 = vsel %vm713, 1, 0
        %vm718 = vcmp.eq.s32.totalorder %v714, 1
        %vm719 = vcmp.eq.s32.totalorder %v715, 1
        %vm720 = vcmp.eq.s32.totalorder %v716, 1
        %vm721 = vcmp.eq.s32.totalorder %v717, 1
        %v722 = vsel %vm718, %v699, 0.0
        %v723 = vsel %vm719, %v698, 0.0
        %v724 = vsel %vm720, %v697, 0.0
        %v725 = vsel %vm721, %v700, 0.0
        %vm726 = vcmp.ge.s32.totalorder %v339, 2
        %vm727 = vcmp.ge.s32.totalorder %v340, 2
        %vm728 = vcmp.ge.s32.totalorder %v341, 2
        %vm729 = vcmp.ge.s32.totalorder %v342, 2
        %v730 = vsel %vm726, 1, 0
        %v731 = vsel %vm727, 1, 0
        %v732 = vsel %vm728, 1, 0
        %v733 = vsel %vm729, 1, 0
        %vm734 = vcmp.eq.s32.totalorder %v730, 1
        %vm735 = vcmp.eq.s32.totalorder %v731, 1
        %vm736 = vcmp.eq.s32.totalorder %v732, 1
        %vm737 = vcmp.eq.s32.totalorder %v733, 1
        %v738 = vsel %vm734, %v709, 0.0
        %v739 = vsel %vm735, %v708, 0.0
        %v740 = vsel %vm736, %v707, 0.0
        %v741 = vsel %vm737, %v706, 0.0
        %742 = vrot.lane.b32.xlu0 %v688, 16
        %v743 = vpop.permute.xlu0 %742
        %744 = vrot.lane.b32.xlu0 %v689, 16
        %v745 = vpop.permute.xlu0 %744
        %746 = vrot.lane.b32.xlu0 %v690, 16
        %v747 = vpop.permute.xlu0 %746
        %748 = vrot.lane.b32.xlu0 %v691, 16
        %v749 = vpop.permute.xlu0 %748
        %v750 = vadd.f32 %v722, %v743
        %v751 = vadd.f32 %v723, %v745
        %v752 = vadd.f32 %v724, %v747
        %v753 = vadd.f32 %v725, %v749
        %754 = vrot.lane.b32.xlu0 %v738, 32
        %v755 = vpop.permute.xlu0 %754
        %756 = vrot.lane.b32.xlu0 %v739, 32
        %v757 = vpop.permute.xlu0 %756
        %758 = vrot.lane.b32.xlu0 %v740, 32
        %v759 = vpop.permute.xlu0 %758
        %760 = vrot.lane.b32.xlu0 %v741, 32
        %v761 = vpop.permute.xlu0 %760
        %v762 = vadd.f32 %v750, %v755
        %v763 = vadd.f32 %v751, %v757
        %v764 = vadd.f32 %v752, %v759
        %v765 = vadd.f32 %v753, %v761
        %v766 = vpack.c.bf16 %v763, %v762
        %v767 = vpack.c.bf16 %v765, %v764
        %s768 = scalar_lea.vmem [#allocation3], 128
        %v769 = vld [vmem:[%s768] sm:$0xf]
        %v770 = vld [vmem:[%s768 + $0x4] sm:$0xf]
        %v771 = vld [vmem:[%s768 + $0x8] sm:$0xf]
        %v772 = vld [vmem:[%s768 + $0xc] sm:$0xf]
        %v773 = vld [vmem:[%s768 + $0x10] sm:$0xf]
        %v774 = vld [vmem:[%s768 + $0x14] sm:$0xf]
        %v775 = vld [vmem:[%s768 + $0x18] sm:$0xf]
        %v776 = vld [vmem:[%s768 + $0x1c] sm:$0xf]
        %v777 = vld [vmem:[%s768 + $0x20] sm:$0xf]
        %v778 = vld [vmem:[%s768 + $0x24] sm:$0xf]
        %v779 = vld [vmem:[%s768 + $0x28] sm:$0xf]
        %v780 = vld [vmem:[%s768 + $0x2c] sm:$0xf]
        %v781 = vld [vmem:[%s768 + $0x30] sm:$0xf]
        %v782 = vld [vmem:[%s768 + $0x34] sm:$0xf]
        %v783 = vld [vmem:[%s768 + $0x38] sm:$0xf]
        %v784 = vld [vmem:[%s768 + $0x3c] sm:$0xf]
        %s785 = scalar_lea.vmem %s2, 2
        %v786 = vld [vmem:[%s785] sm:$0x1]
        %v788 = vperm.slane %v786, 0
        %v806 = vunpack.c.l.b16 %v769
        %v807 = vunpack.c.l.b16 %v770
        %v808 = vunpack.c.l.b16 %v771
        %v809 = vunpack.c.l.b16 %v772
        %v810 = vunpack.c.l.b16 %v773
        %v811 = vunpack.c.l.b16 %v774
        %v812 = vunpack.c.l.b16 %v775
        %v813 = vunpack.c.l.b16 %v776
        %v814 = vunpack.c.l.b16 %v777
        %v815 = vunpack.c.l.b16 %v778
        %v816 = vunpack.c.l.b16 %v779
        %v817 = vunpack.c.l.b16 %v780
        %v818 = vunpack.c.l.b16 %v781
        %v819 = vunpack.c.l.b16 %v782
        %v820 = vunpack.c.l.b16 %v783
        %v821 = vunpack.c.l.b16 %v784
        %v822 = vpack.c.b16 %v807, %v806
        %v823 = vpack.c.b16 %v809, %v808
        %v824 = vpack.c.b16 %v811, %v810
        %v825 = vpack.c.b16 %v813, %v812
        %v826 = vpack.c.b16 %v815, %v814
        %v827 = vpack.c.b16 %v817, %v816
        %v828 = vpack.c.b16 %v819, %v818
        %v829 = vpack.c.b16 %v821, %v820
        %838 = vmatpush.bf16.msra.mxu0 %v829
        %839 = vmatpush.bf16.msra.mxu0 %v828
        %840 = vmatpush.bf16.msra.mxu0 %v827
        %841 = vmatpush.bf16.msra.mxu0 %v826
        %842 = vmatpush.bf16.msra.mxu0 %v825
        %843 = vmatpush.bf16.msra.mxu0 %v824
        %844 = vmatpush.bf16.msra.mxu0 %v823
        %845 = vmatpush.bf16.msra.mxu0 %v822
        %846 = vmatmul.bf16.gmra.mxu0 %v766
        %v847 = vpop.f32.mrf.mxu0
        %v848 = vadd.f32 %v788, %v847
        %v849 = vpop.f32.mrf.mxu0
        %v850 = vadd.f32 %v788, %v849
        %851 = vmatmul.bf16.gmra.mxu0 %v767
        %v852 = vpop.f32.mrf.mxu0
        %v853 = vadd.f32 %v788, %v852
        %v854 = vpop.f32.mrf.mxu0
        %v855 = vadd.f32 %v788, %v854
        %856 = vdwg.mxu0
        %s857 = sld [smem:[#allocation6 + $0x2]]
        %vm858 = vcmp.gt.f32.partialorder %v848, 0.0
        %vm859 = vcmp.gt.f32.partialorder %v850, 0.0
        %vm860 = vcmp.gt.f32.partialorder %v853, 0.0
        %vm861 = vcmp.gt.f32.partialorder %v855, 0.0
        %v862 = vstv %s857
        %v863 = vmul.f32 %v862, %v848
        %v864 = vmul.f32 %v862, %v850
        %v865 = vmul.f32 %v862, %v853
        %v866 = vmul.f32 %v862, %v855
        %v867 = vsel %vm858, %v848, %v863
        %v868 = vsel %vm859, %v850, %v864
        %v869 = vsel %vm860, %v853, %v865
        %v870 = vsel %vm861, %v855, %v866
        %v871 = vpack.c.bf16 %v867, %v867
        %v872 = vpack.c.bf16 %v868, %v868
        %v873 = vpack.c.bf16 %v869, %v869
        %v874 = vpack.c.bf16 %v870, %v870
        %v875 = vunpack.c.l.bf16 %v871
        %v876 = vunpack.c.l.bf16 %v872
        %v877 = vunpack.c.l.bf16 %v873
        %v878 = vunpack.c.l.bf16 %v874
        %v879 = vrot.slane %v875, 1
        %v880 = vrot.slane %v876, 1
        %v881 = vrot.slane %v877, 1
        %v882 = vrot.slane %v878, 1
        %vm883 = vcmp.lt.s32.totalorder %v291, 7
        %v884 = vsel %vm883, %v881, %v882
        %v885 = vsel %vm883, %v880, %v881
        %v886 = vsel %vm883, %v879, %v880
        %v887 = vsel %vm883, %v882, %v879
        %v888 = vrot.slane %v875, 7
        %v889 = vrot.slane %v876, 7
        %v890 = vrot.slane %v877, 7
        %v891 = vrot.slane %v878, 7
        %vm892 = vcmp.lt.s32.totalorder %v291, 1
        %v893 = vsel %vm892, %v890, %v891
        %v894 = vsel %vm892, %v889, %v890
        %v895 = vsel %vm892, %v888, %v889
        %v896 = vsel %vm892, %v891, %v888
        %vm897 = vcmp.lt.s32.totalorder %v339, 31
        %vm898 = vcmp.lt.s32.totalorder %v340, 31
        %vm899 = vcmp.lt.s32.totalorder %v341, 31
        %vm900 = vcmp.lt.s32.totalorder %v342, 31
        %v901 = vsel %vm897, 1, 0
        %v902 = vsel %vm898, 1, 0
        %v903 = vsel %vm899, 1, 0
        %v904 = vsel %vm900, 1, 0
        %vm905 = vcmp.eq.s32.totalorder %v901, 1
        %vm906 = vcmp.eq.s32.totalorder %v902, 1
        %vm907 = vcmp.eq.s32.totalorder %v903, 1
        %vm908 = vcmp.eq.s32.totalorder %v904, 1
        %v909 = vsel %vm905, %v886, 0.0
        %v910 = vsel %vm906, %v885, 0.0
        %v911 = vsel %vm907, %v884, 0.0
        %v912 = vsel %vm908, %v887, 0.0
        %vm913 = vcmp.ge.s32.totalorder %v339, 1
        %vm914 = vcmp.ge.s32.totalorder %v340, 1
        %vm915 = vcmp.ge.s32.totalorder %v341, 1
        %vm916 = vcmp.ge.s32.totalorder %v342, 1
        %v917 = vsel %vm913, 1, 0
        %v918 = vsel %vm914, 1, 0
        %v919 = vsel %vm915, 1, 0
        %v920 = vsel %vm916, 1, 0
        %vm921 = vcmp.eq.s32.totalorder %v917, 1
        %vm922 = vcmp.eq.s32.totalorder %v918, 1
        %vm923 = vcmp.eq.s32.totalorder %v919, 1
        %vm924 = vcmp.eq.s32.totalorder %v920, 1
        %v925 = vsel %vm921, %v896, 0.0
        %v926 = vsel %vm922, %v895, 0.0
        %v927 = vsel %vm923, %v894, 0.0
        %v928 = vsel %vm924, %v893, 0.0
        %929 = vrot.lane.b32.xlu0 %v875, 16
        %v930 = vpop.permute.xlu0 %929
        %931 = vrot.lane.b32.xlu0 %v876, 16
        %v932 = vpop.permute.xlu0 %931
        %933 = vrot.lane.b32.xlu0 %v877, 16
        %v934 = vpop.permute.xlu0 %933
        %935 = vrot.lane.b32.xlu0 %v878, 16
        %v936 = vpop.permute.xlu0 %935
        %v937 = vadd.f32 %v909, %v930
        %v938 = vadd.f32 %v910, %v932
        %v939 = vadd.f32 %v911, %v934
        %v940 = vadd.f32 %v912, %v936
        %941 = vrot.lane.b32.xlu0 %v925, 32
        %v942 = vpop.permute.xlu0 %941
        %943 = vrot.lane.b32.xlu0 %v926, 32
        %v944 = vpop.permute.xlu0 %943
        %945 = vrot.lane.b32.xlu0 %v927, 32
        %v946 = vpop.permute.xlu0 %945
        %947 = vrot.lane.b32.xlu0 %v928, 32
        %v948 = vpop.permute.xlu0 %947
        %v949 = vadd.f32 %v937, %v942
        %v950 = vadd.f32 %v938, %v944
        %v951 = vadd.f32 %v939, %v946
        %v952 = vadd.f32 %v940, %v948
        %v953 = vpack.c.bf16 %v950, %v949
        %v954 = vpack.c.bf16 %v952, %v951
        %s955 = scalar_lea.vmem [#allocation3], 192
        %v956 = vld [vmem:[%s955] sm:$0xf]
        %v957 = vld [vmem:[%s955 + $0x4] sm:$0xf]
        %v958 = vld [vmem:[%s955 + $0x8] sm:$0xf]
        %v959 = vld [vmem:[%s955 + $0xc] sm:$0xf]
        %v960 = vld [vmem:[%s955 + $0x10] sm:$0xf]
        %v961 = vld [vmem:[%s955 + $0x14] sm:$0xf]
        %v962 = vld [vmem:[%s955 + $0x18] sm:$0xf]
        %v963 = vld [vmem:[%s955 + $0x1c] sm:$0xf]
        %v964 = vld [vmem:[%s955 + $0x20] sm:$0xf]
        %v965 = vld [vmem:[%s955 + $0x24] sm:$0xf]
        %v966 = vld [vmem:[%s955 + $0x28] sm:$0xf]
        %v967 = vld [vmem:[%s955 + $0x2c] sm:$0xf]
        %v968 = vld [vmem:[%s955 + $0x30] sm:$0xf]
        %v969 = vld [vmem:[%s955 + $0x34] sm:$0xf]
        %v970 = vld [vmem:[%s955 + $0x38] sm:$0xf]
        %v971 = vld [vmem:[%s955 + $0x3c] sm:$0xf]
        %s972 = scalar_lea.vmem %s2, 3
        %v973 = vld [vmem:[%s972] sm:$0x1]
        %v975 = vperm.slane %v973, 0
        %v993 = vunpack.c.l.b16 %v956
        %v994 = vunpack.c.l.b16 %v957
        %v995 = vunpack.c.l.b16 %v958
        %v996 = vunpack.c.l.b16 %v959
        %v997 = vunpack.c.l.b16 %v960
        %v998 = vunpack.c.l.b16 %v961
        %v999 = vunpack.c.l.b16 %v962
        %v1000 = vunpack.c.l.b16 %v963
        %v1001 = vunpack.c.l.b16 %v964
        %v1002 = vunpack.c.l.b16 %v965
        %v1003 = vunpack.c.l.b16 %v966
        %v1004 = vunpack.c.l.b16 %v967
        %v1005 = vunpack.c.l.b16 %v968
        %v1006 = vunpack.c.l.b16 %v969
        %v1007 = vunpack.c.l.b16 %v970
        %v1008 = vunpack.c.l.b16 %v971
        %v1009 = vpack.c.b16 %v994, %v993
        %v1010 = vpack.c.b16 %v996, %v995
        %v1011 = vpack.c.b16 %v998, %v997
        %v1012 = vpack.c.b16 %v1000, %v999
        %v1013 = vpack.c.b16 %v1002, %v1001
        %v1014 = vpack.c.b16 %v1004, %v1003
        %v1015 = vpack.c.b16 %v1006, %v1005
        %v1016 = vpack.c.b16 %v1008, %v1007
        %1025 = vmatpush.bf16.msra.mxu0 %v1016
        %1026 = vmatpush.bf16.msra.mxu0 %v1015
        %1027 = vmatpush.bf16.msra.mxu0 %v1014
        %1028 = vmatpush.bf16.msra.mxu0 %v1013
        %1029 = vmatpush.bf16.msra.mxu0 %v1012
        %1030 = vmatpush.bf16.msra.mxu0 %v1011
        %1031 = vmatpush.bf16.msra.mxu0 %v1010
        %1032 = vmatpush.bf16.msra.mxu0 %v1009
        %1033 = vmatmul.bf16.gmra.mxu0 %v953
        %v1034 = vpop.f32.mrf.mxu0
        %v1035 = vadd.f32 %v975, %v1034
        %v1036 = vpop.f32.mrf.mxu0
        %v1037 = vadd.f32 %v975, %v1036
        %1038 = vmatmul.bf16.gmra.mxu0 %v954
        %v1039 = vpop.f32.mrf.mxu0
        %v1040 = vadd.f32 %v975, %v1039
        %v1041 = vpop.f32.mrf.mxu0
        %v1042 = vadd.f32 %v975, %v1041
        %1043 = vdwg.mxu0
        %s1044 = sld [smem:[#allocation6 + $0x3]]
        %vm1045 = vcmp.gt.f32.partialorder %v1035, 0.0
        %vm1046 = vcmp.gt.f32.partialorder %v1037, 0.0
        %vm1047 = vcmp.gt.f32.partialorder %v1040, 0.0
        %vm1048 = vcmp.gt.f32.partialorder %v1042, 0.0
        %v1049 = vstv %s1044
        %v1050 = vmul.f32 %v1049, %v1035
        %v1051 = vmul.f32 %v1049, %v1037
        %v1052 = vmul.f32 %v1049, %v1040
        %v1053 = vmul.f32 %v1049, %v1042
        %v1054 = vsel %vm1045, %v1035, %v1050
        %v1055 = vsel %vm1046, %v1037, %v1051
        %v1056 = vsel %vm1047, %v1040, %v1052
        %v1057 = vsel %vm1048, %v1042, %v1053
        %v1058 = vpack.c.bf16 %v1055, %v1054
        %v1059 = vpack.c.bf16 %v1057, %v1056
        %v1060 = vld [vmem:[%s4] sm:$0xf]
        %v1061 = vld [vmem:[%s4 + $0x4] sm:$0xf]
        %v1062 = vld [vmem:[%s4 + $0x8] sm:$0xf]
        %v1063 = vld [vmem:[%s4 + $0xc] sm:$0xf]
        %v1064 = vld [vmem:[%s4 + $0x10] sm:$0xf]
        %v1065 = vld [vmem:[%s4 + $0x14] sm:$0xf]
        %v1066 = vld [vmem:[%s4 + $0x18] sm:$0xf]
        %v1067 = vld [vmem:[%s4 + $0x1c] sm:$0xf]
        %v1068 = vld [vmem:[%s4 + $0x20] sm:$0xf]
        %v1069 = vld [vmem:[%s4 + $0x24] sm:$0xf]
        %v1070 = vld [vmem:[%s4 + $0x28] sm:$0xf]
        %v1071 = vld [vmem:[%s4 + $0x2c] sm:$0xf]
        %v1072 = vld [vmem:[%s4 + $0x30] sm:$0xf]
        %v1073 = vld [vmem:[%s4 + $0x34] sm:$0xf]
        %v1074 = vld [vmem:[%s4 + $0x38] sm:$0xf]
        %v1075 = vld [vmem:[%s4 + $0x3c] sm:$0xf]
        %v1092 = vunpack.c.l.b16 %v1060
        %v1093 = vunpack.c.l.b16 %v1061
        %v1094 = vunpack.c.l.b16 %v1062
        %v1095 = vunpack.c.l.b16 %v1063
        %v1096 = vunpack.c.l.b16 %v1064
        %v1097 = vunpack.c.l.b16 %v1065
        %v1098 = vunpack.c.l.b16 %v1066
        %v1099 = vunpack.c.l.b16 %v1067
        %v1100 = vunpack.c.l.b16 %v1068
        %v1101 = vunpack.c.l.b16 %v1069
        %v1102 = vunpack.c.l.b16 %v1070
        %v1103 = vunpack.c.l.b16 %v1071
        %v1104 = vunpack.c.l.b16 %v1072
        %v1105 = vunpack.c.l.b16 %v1073
        %v1106 = vunpack.c.l.b16 %v1074
        %v1107 = vunpack.c.l.b16 %v1075
        %v1108 = vpack.c.b16 %v1093, %v1092
        %v1109 = vpack.c.b16 %v1095, %v1094
        %v1110 = vpack.c.b16 %v1097, %v1096
        %v1111 = vpack.c.b16 %v1099, %v1098
        %v1112 = vpack.c.b16 %v1101, %v1100
        %v1113 = vpack.c.b16 %v1103, %v1102
        %v1114 = vpack.c.b16 %v1105, %v1104
        %v1115 = vpack.c.b16 %v1107, %v1106
        %1124 = vmatpush.bf16.msra.mxu0 %v1115
        %1125 = vmatpush.bf16.msra.mxu0 %v1114
        %1126 = vmatpush.bf16.msra.mxu0 %v1113
        %1127 = vmatpush.bf16.msra.mxu0 %v1112
        %1128 = vmatpush.bf16.msra.mxu0 %v1111
        %1129 = vmatpush.bf16.msra.mxu0 %v1110
        %1130 = vmatpush.bf16.msra.mxu0 %v1109
        %1131 = vmatpush.bf16.msra.mxu0 %v1108
        %1132 = vmatmul.bf16.gmra.mxu0 %v1058
        %v1133 = vpop.f32.mrf.mxu0
        %v1134 = vadd.f32 0.0, %v1133
        %v1135 = vpop.f32.mrf.mxu0
        %v1136 = vadd.f32 0.0, %v1135
        %1137 = vmatmul.bf16.gmra.mxu0 %v1059
        %v1138 = vpop.f32.mrf.mxu0
        %v1139 = vadd.f32 0.0, %v1138
        %v1140 = vpop.f32.mrf.mxu0
        %v1141 = vadd.f32 0.0, %v1140
        %1142 = vdwg.mxu0
        %s1143 = sld [smem:[#allocation2]]
        %v1144 = vrot.slane %v1134, 7
        %v1145 = vrot.slane %v1136, 7
        %v1146 = vrot.slane %v1139, 7
        %v1147 = vrot.slane %v1141, 7
        %v1148 = vsel %vm892, %v1146, %v1147
        %v1149 = vsel %vm892, %v1145, %v1146
        %v1150 = vsel %vm892, %v1144, %v1145
        %v1151 = vsel %vm892, %v1147, %v1144
        %v1152 = vsel %vm921, %v1151, 0.0
        %v1153 = vsel %vm922, %v1150, 0.0
        %v1154 = vsel %vm923, %v1149, 0.0
        %v1155 = vsel %vm924, %v1148, 0.0
        %1160 = vrot.lane.b32.xlu0 %v1152, 120
        %v1161 = vpop.permute.xlu0 %1160
        %1162 = vrot.lane.b32.xlu0 %v1153, 120
        %v1163 = vpop.permute.xlu0 %1162
        %1164 = vrot.lane.b32.xlu0 %v1154, 120
        %v1165 = vpop.permute.xlu0 %1164
        %1166 = vrot.lane.b32.xlu0 %v1155, 120
        %v1167 = vpop.permute.xlu0 %1166
        %v1172 = vadd.f32 %v1134, %v1161
        %v1173 = vadd.f32 %v1136, %v1163
        %v1174 = vadd.f32 %v1139, %v1165
        %v1175 = vadd.f32 %v1141, %v1167
        %v1176 = vstv %s1143
        %v1177 = vadd.f32 %v1172, %v1176
        %v1178 = vadd.f32 %v1173, %v1176
        %v1179 = vadd.f32 %v1174, %v1176
        %v1180 = vadd.f32 %v1175, %v1176
        %vm1181 = vcmask 64512
        %1182 = vst.msk [vmem:[%s285] sm:$0xff] %vm1181, %v1177
        %1183 = vst.msk [vmem:[%s285 + $0x8] sm:$0xff] %vm1181, %v1178
        %1184 = vst.msk [vmem:[%s285 + $0x10] sm:$0xff] %vm1181, %v1179
        %1185 = vst.msk [vmem:[%s285 + $0x18] sm:$0xff] %vm1181, %v1180
        %v1186 = vadd.f32 %v1141, %v1176
        %1188 = vrot.lane.b32.xlu0 %v1186, 120
        %v1189 = vpop.permute.xlu0 %1188
        %vm1191 = vcmask 64519
        %1192 = vst.msk [vmem:[%s285 + $0x19] sm:$0x80] %vm1191, %v1189
        %p1193 = scmp.lt.s32.totalorder %s20, 1
        %s1194 = scalar_select %p1193, %s20, 1
        %s1195 = smul.addr %s1194, 5
        %s1196 = smul.addr %s1195, 8
        %s1197 = scalar_lea.vmem %s6, %s1196
        // Predicated region
        $region53: #{tpu_custom_call.1} parent=43 // pred_check
          %p1198 = pneg %p169
        $region54: #{tpu_custom_call.1} parent=43 // pred_check_branch
          %1200 = sbr.rel (%p1198) target = $region56
        $region55: #{tpu_custom_call.1} parent=43 // pred_region
          _
        $region56: #{tpu_custom_call.1} parent=43 // pred_fallthru
          _
      $region44: #{tpu_custom_call.1} parent=5 // pred_fallthru
        _
      %p1201 = scmp.le.s32.totalorder 2, %s15
      // Predicated region
      $region57: #{tpu_custom_call.1} parent=5 // pred_check
        %p1202 = pneg %p1201
      $region58: #{tpu_custom_call.1} parent=5 // pred_check_branch
        %1204 = sbr.rel (%p1202) target = $region60
      $region59: #{tpu_custom_call.1} parent=5 // pred_region
        %s1205 = ssub.s32 %s15, 2
        // Predicated region
        $region61: #{tpu_custom_call.1} parent=59 // pred_check
          %p1206 = pneg %p175
        $region62: #{tpu_custom_call.1} parent=59 // pred_check_branch
          %1208 = sbr.rel (%p1206) target = $region64
        $region63: #{tpu_custom_call.1} parent=59 // pred_region
          %p1209 = scmp.lt.s32.totalorder %s21, 1
          %s1210 = scalar_select %p1209, %s21, 1
          %s1211 = smul.addr %s1210, 5
          %s1212 = smul.addr %s1211, 8
          %s1213 = scalar_lea.vmem %s6, %s1212
        $region64: #{tpu_custom_call.1} parent=59 // pred_fallthru
          _
      $region60: #{tpu_custom_call.1} parent=5 // pred_fallthru
        _
    $region6: #{tpu_custom_call.1} parent=1 // loop_footer
      %s19 = sadd.s32 1, %s15
    $region7: #{tpu_custom_call.1} parent=1 // loop_footer_branch
      %14 = sbr.rel target = $region3
    $region8: #{tpu_custom_call.1} parent=1 // loop_exit
      _
    %1214 = vsyncpa [#allocation4], 1
    %s1215 = scalar_lea.sflag [#allocation4], 1
    %1216 = vsyncpa %s1215, 1
    %1217 = vsyncpa [#allocation5], 1
    %s1218 = scalar_lea.sflag [#allocation5], 1
    %1219 = vsyncpa %s1218, 1

</llo_original>
